<compile_context>
chip_gen: v5e
topology: v5e:2x2
jax: 0.10.0
libtpu: 0.0.40
codegen_flags: <defaults>
</compile_context>

<pallas_src>
import functools

import jax
import jax.numpy as jnp
from jax import lax
from jax.experimental import pallas as pl
from jax.experimental.pallas import tpu as pltpu


# ---------------------------------------------------------------------------
# Kernels
# ---------------------------------------------------------------------------
def _matmul_stats_kernel(x_ref, wc_ref, bc_ref, z_ref, stats_ref):
    """Phase 1: z_tile = x_tile @ Wc + bc  (bf16 in, f32 accumulate)
    and per-tile BatchNorm partial statistics (sum, sum of squares)."""
    z = jnp.dot(x_ref[...], wc_ref[...],
                preferred_element_type=jnp.float32) + bc_ref[...]
    z_ref[...] = z
    # One pass over z: accumulate sum and sum-of-squares (var = E[z^2]-mean^2).
    stats_ref[:, 0:1, :] = jnp.sum(z, axis=0, keepdims=True)[None]
    stats_ref[:, 1:2, :] = jnp.sum(z * z, axis=0, keepdims=True)[None]


def _bn_relu_kernel(z_ref, stats_ref, gamma_ref, beta_ref, o_ref, *,
                    inv_batch, eps):
    """Phase 2: reduce the per-tile stats to full-batch mean/var, then
    out = ReLU(gamma * (z - mean) * rsqrt(var + eps) + beta)."""
    s = jnp.sum(stats_ref[...], axis=0)            # (2, F) cross-tile reduce
    mean = s[0:1, :] * inv_batch                   # (1, F)
    var = s[1:2, :] * inv_batch - mean * mean      # biased batch variance
    scale = gamma_ref[...] * lax.rsqrt(var + eps)  # (1, F)
    shift = beta_ref[...] - mean * scale
    o_ref[...] = jnp.maximum(z_ref[...] * scale + shift, 0.0)


# ---------------------------------------------------------------------------
# Wrapper
# ---------------------------------------------------------------------------
def _pick_tile(batch):
    for t in (256, 128, 64, 32, 16, 8):
        if batch % t == 0:
            return t
    return batch  # tiny / odd batch: single tile (block == full array dims)


def fp_model(x, fp, *, tile=None):
    """x: (B, 1024) float32 -> (B, 64) float32 (FpModel.forward)."""
    B, D = x.shape
    F = fp["wc"].shape[1]
    TB = tile if tile is not None else _pick_tile(B)
    if B % TB != 0:
        TB = B
    num_tiles = B // TB

    # bf16 activations halve the x DMA and let the MXU run in bf16.
    x_bf = x.astype(jnp.bfloat16)

    parallel = pltpu.CompilerParams(dimension_semantics=("parallel",))

    # Phase 1: fused matmul + per-tile BN partial statistics.
    z, pstats = pl.pallas_call(
        _matmul_stats_kernel,
        grid=(num_tiles,),
        in_specs=[
            pl.BlockSpec((TB, D), lambda i: (i, 0)),        # x tile (bf16)
            pl.BlockSpec((D, F), lambda i: (0, 0)),         # Wc (bf16, resident)
            pl.BlockSpec((1, F), lambda i: (0, 0)),         # bc (f32)
        ],
        out_specs=[
            pl.BlockSpec((TB, F), lambda i: (i, 0)),        # z tile (f32)
            pl.BlockSpec((1, 2, F), lambda i: (i, 0, 0)),   # per-tile stats
        ],
        out_shape=[
            jax.ShapeDtypeStruct((B, F), jnp.float32),
            jax.ShapeDtypeStruct((num_tiles, 2, F), jnp.float32),
        ],
        compiler_params=parallel,
    )(x_bf, fp["wc"], fp["bc"])

    # Phase 2: full-batch BatchNorm (training-mode stats) + ReLU.
    kernel2 = functools.partial(_bn_relu_kernel, inv_batch=1.0 / B, eps=1e-5)
    out = pl.pallas_call(
        kernel2,
        grid=(num_tiles,),
        in_specs=[
            pl.BlockSpec((TB, F), lambda i: (i, 0)),                 # z tile
            pl.BlockSpec((num_tiles, 2, F), lambda i: (0, 0, 0)),    # all stats
            pl.BlockSpec((1, F), lambda i: (0, 0)),                  # gamma
            pl.BlockSpec((1, F), lambda i: (0, 0)),                  # beta
        ],
        out_specs=pl.BlockSpec((TB, F), lambda i: (i, 0)),
        out_shape=jax.ShapeDtypeStruct((B, F), jnp.float32),
        compiler_params=parallel,
    )(z, pstats, fp["gamma"], fp["beta"])
    return out


# ---------------------------------------------------------------------------
# Parameters (PyTorch-default-style init) and offline folding
# ---------------------------------------------------------------------------
def init_params(key):
    k1, k2, k3, k4 = jax.random.split(key, 4)
    b1 = 1.0 / (1024.0 ** 0.5)   # dense1 fan_in = 1024
    b2 = 1.0 / (128.0 ** 0.5)    # fp[0]  fan_in = 128
    return {
        "w1":  jax.random.uniform(k1, (1024, 128), jnp.float32, -b1, b1),
        "b1":  jax.random.uniform(k2, (1, 128),    jnp.float32, -b1, b1),
        "wfp": jax.random.uniform(k3, (128, 64),   jnp.float32, -b2, b2),
        "bfp": jax.random.uniform(k4, (1, 64),     jnp.float32, -b2, b2),
        "gamma": jnp.ones((1, 64), jnp.float32),
        "beta":  jnp.zeros((1, 64), jnp.float32),
        # self.fc = Linear(128, 1) exists in __init__ but is unused in forward().
    }


def fold_params(p):
    """Fold dense1 and fp[0] into one affine map (valid because the softmax
    attention contraction is the identity), store weights in bf16."""
    wc = (p["w1"] @ p["wfp"]).astype(jnp.bfloat16)       # (1024, 64)
    bc = p["b1"] @ p["wfp"] + p["bfp"]                   # (1, 64) f32
    return {"wc": wc, "bc": bc, "gamma": p["gamma"], "beta": p["beta"]}


# ---------------------------------------------------------------------------
# Pure-JAX references
# ---------------------------------------------------------------------------
def fp_model_ref_full(x, p):
    """Literal f32 transcription of the PyTorch forward (softmax kept)."""
    h = x @ p["w1"] + p["b1"]
    alpha = jax.nn.softmax(h, axis=-1)
    att = jnp.einsum("bi,bj->bj", alpha, h)   # == sum_i alpha[b,i] * h[b,:]
    z = att @ p["wfp"] + p["bfp"]
    mean = jnp.mean(z, axis=0, keepdims=True)
    var = jnp.mean((z - mean) ** 2, axis=0, keepdims=True)
    y = p["gamma"] * (z - mean) * lax.rsqrt(var + 1e-5) + p["beta"]
    return jnp.maximum(y, 0.0)


def fp_model_ref_matched(x, fp):
    """Reference with the same numerics as the kernel (bf16 inputs, folded W)."""
    z = jnp.dot(x.astype(jnp.bfloat16), fp["wc"],
                preferred_element_type=jnp.float32) + fp["bc"]
    mean = jnp.mean(z, axis=0, keepdims=True)
    var = jnp.mean(z * z, axis=0, keepdims=True) - mean * mean
    y = fp["gamma"] * (z - mean) * lax.rsqrt(var + 1e-5) + fp["beta"]
    return jnp.maximum(y, 0.0)


if __name__ == "__main__":
    B = 256  # multiple of the 128-row tile; BatchNorm needs B > 1
    key = jax.random.PRNGKey(0)
    kx, kp = jax.random.split(key)
    x = jax.random.normal(kx, (B, 1024), jnp.float32)
    params = init_params(kp)
    fparams = fold_params(params)

    # tile=128 -> grid=(2,): exercises the tiled pipeline and two-phase BN.
    out = fp_model(x, fparams, tile=128)
    jax.block_until_ready(out)

    assert out.shape == (B, 64) and out.dtype == jnp.float32

    # Tight check vs. the numerics-matched reference (same bf16 folded matmul).
    ref_m = fp_model_ref_matched(x, fparams)
    assert jnp.allclose(out, ref_m, atol=1e-3, rtol=1e-3), (
        "matched-ref mismatch", float(jnp.max(jnp.abs(out - ref_m))))

    # Loose check vs. the literal f32 PyTorch-semantics forward (softmax kept);
    # the difference is only bf16 rounding of the 1024-deep contraction.
    ref_f = fp_model_ref_full(x, params)
    assert jnp.allclose(out, ref_f, atol=2.5e-2, rtol=2.5e-2), (
        "full-ref mismatch", float(jnp.max(jnp.abs(out - ref_f))))

    print("KERNEL_OK")
</pallas_src>

<mosaic_0001>
module attributes {stable_mosaic.version = 11 : i64} {
  func.func @_matmul_stats_kernel(%arg0: i32, %arg1: memref<128x1024xbf16, #tpu.memory_space<vmem>>, %arg2: memref<1024x64xbf16, #tpu.memory_space<vmem>>, %arg3: memref<1x64xf32, #tpu.memory_space<vmem>>, %arg4: memref<128x64xf32, #tpu.memory_space<vmem>>, %arg5: memref<1x2x64xf32, #tpu.memory_space<vmem>>) attributes {dimension_semantics = [#tpu.dimension_semantics<parallel>], iteration_bounds = array<i64: 2>, scalar_prefetch = 0 : i64, scratch_operands = 0 : i64, tpu.core_type = #tpu.core_type<tc>, window_params = [{transform_indices = @transform_0, window_bounds = array<i64: 128, 1024>}, {pipeline_mode = #tpu.pipeline_mode<synchronous>, transform_indices = @transform_1, window_bounds = array<i64: 1024, 64>}, {pipeline_mode = #tpu.pipeline_mode<synchronous>, transform_indices = @transform_2, window_bounds = array<i64: 1, 64>}, {transform_indices = @transform_3, window_bounds = array<i64: 128, 64>}, {transform_indices = @transform_4, window_bounds = array<i64: 1, 2, 64>}]} {
    %c0 = arith.constant 0 : index
    %c0_0 = arith.constant 0 : index
    %0 = vector.load %arg1[%c0, %c0_0] : memref<128x1024xbf16, #tpu.memory_space<vmem>>, vector<128x1024xbf16>
    %c0_1 = arith.constant 0 : index
    %c0_2 = arith.constant 0 : index
    %1 = vector.load %arg2[%c0_1, %c0_2] : memref<1024x64xbf16, #tpu.memory_space<vmem>>, vector<1024x64xbf16>
    %cst = arith.constant dense<0.000000e+00> : vector<128x64xf32>
    %2 = tpu.matmul %0, %1, %cst {dimension_numbers = #tpu.dot_dimension_numbers<[1], [0], [0], [1], [0, 0, 1, 1], [], []>} : vector<128x1024xbf16>, vector<1024x64xbf16>, vector<128x64xf32> -> vector<128x64xf32>
    %c0_3 = arith.constant 0 : index
    %c0_4 = arith.constant 0 : index
    %3 = vector.load %arg3[%c0_3, %c0_4] : memref<1x64xf32, #tpu.memory_space<vmem>>, vector<1x64xf32>
    %4 = vector.broadcast %3 : vector<1x64xf32> to vector<128x64xf32>
    %5 = arith.addf %2, %4 : vector<128x64xf32>
    %c0_5 = arith.constant 0 : index
    %c0_6 = arith.constant 0 : index
    %6 = vector.load %arg4[%c0_5, %c0_6] : memref<128x64xf32, #tpu.memory_space<vmem>>, vector<128x64xf32>
    tpu.vector_store %arg4[%c0_5, %c0_6], %5 {strides = array<i32>} : memref<128x64xf32, #tpu.memory_space<vmem>>, vector<128x64xf32>,
    %cst_7 = arith.constant dense<0.000000e+00> : vector<64xf32>
    %7 = vector.multi_reduction <add>, %5, %cst_7 [0] : vector<128x64xf32> to vector<64xf32>
    %8 = vector.shape_cast %7 : vector<64xf32> to vector<1x64xf32>
    %9 = vector.shape_cast %8 : vector<1x64xf32> to vector<1x1x64xf32>
    %c0_8 = arith.constant 0 : index
    %c0_9 = arith.constant 0 : index
    %c0_10 = arith.constant 0 : index
    %10 = vector.load %arg5[%c0_8, %c0_9, %c0_10] : memref<1x2x64xf32, #tpu.memory_space<vmem>>, vector<1x1x64xf32>
    tpu.vector_store %arg5[%c0_8, %c0_9, %c0_10], %9 {strides = array<i32>} : memref<1x2x64xf32, #tpu.memory_space<vmem>>, vector<1x1x64xf32>,
    %11 = arith.mulf %5, %5 : vector<128x64xf32>
    %cst_11 = arith.constant dense<0.000000e+00> : vector<64xf32>
    %12 = vector.multi_reduction <add>, %11, %cst_11 [0] : vector<128x64xf32> to vector<64xf32>
    %13 = vector.shape_cast %12 : vector<64xf32> to vector<1x64xf32>
    %14 = vector.shape_cast %13 : vector<1x64xf32> to vector<1x1x64xf32>
    %c0_12 = arith.constant 0 : index
    %c1 = arith.constant 1 : index
    %c0_13 = arith.constant 0 : index
    %15 = vector.load %arg5[%c0_12, %c1, %c0_13] : memref<1x2x64xf32, #tpu.memory_space<vmem>>, vector<1x1x64xf32>
    tpu.vector_store %arg5[%c0_12, %c1, %c0_13], %14 {strides = array<i32>} : memref<1x2x64xf32, #tpu.memory_space<vmem>>, vector<1x1x64xf32>,
    return
  }
  func.func @transform_0(%arg0: i32) -> (i32, i32) {
    %c0_i32 = arith.constant 0 : i32
    %c0_i32_0 = arith.constant 0 : i32
    return %arg0, %c0_i32 : i32, i32
  }
  func.func @transform_1(%arg0: i32) -> (i32, i32) {
    %c0_i32 = arith.constant 0 : i32
    %c0_i32_0 = arith.constant 0 : i32
    %c0_i32_1 = arith.constant 0 : i32
    return %c0_i32, %c0_i32_0 : i32, i32
  }
  func.func @transform_2(%arg0: i32) -> (i32, i32) {
    %c0_i32 = arith.constant 0 : i32
    %c0_i32_0 = arith.constant 0 : i32
    %c0_i32_1 = arith.constant 0 : i32
    return %c0_i32, %c0_i32_0 : i32, i32
  }
  func.func @transform_3(%arg0: i32) -> (i32, i32) {
    %c0_i32 = arith.constant 0 : i32
    %c0_i32_0 = arith.constant 0 : i32
    return %arg0, %c0_i32 : i32, i32
  }
  func.func @transform_4(%arg0: i32) -> (i32, i32, i32) {
    %c0_i32 = arith.constant 0 : i32
    %c0_i32_0 = arith.constant 0 : i32
    %c0_i32_1 = arith.constant 0 : i32
    return %arg0, %c0_i32, %c0_i32_0 : i32, i32, i32
  }
}

</mosaic_0001>

<llo_original>
// kernel: tpu_custom_call.1
$region0: #{tpu_custom_call.1}
  #allocation0 [shape = 'u32[]', space=smem, size = 0x4, offset = 0x4, fixed_abs, tag = 'smem constant byte address 0x4 - core index']
  #allocation1 [shape = 'u32[72,128]{1,0:T(1,128)}', space=vmem, size = 0x9000, scoped, tag = 'internal scratch']
  %s0 = inlined_call_operand.hbm [shape: bf16[256,1024], index: 0, kind: input, shape index: {}]
  %s1 = inlined_call_operand.vmem [shape: bf16[1024,64], index: 1, kind: input, shape index: {}]
  %s2 = inlined_call_operand.vmem [shape: f32[1,64], index: 2, kind: input, shape index: {}]
  %s3 = inlined_call_operand.vmem [shape: f32[256,64], index: 3, kind: output, shape index: {0}]
  %s4 = inlined_call_operand.hbm [shape: f32[2,2,64], index: 4, kind: output, shape index: {1}]
  %5 = xla_tuple %s3, %s4
  %s6 = sld [smem:[#allocation0]]
  $region57: #{tpu_custom_call.1} parent=0
    _
  %s8 = ssub.s32 1, %s6
  %s9 = scalar_select 0, %s8, %s6
  $region1: #{tpu_custom_call.1} parent=0
    #allocation2 [shape = 'u8[524288]{0}', space=vmem, size = 0x80000, scoped, tag = 'input window, operand 0']
    #allocation3 [shape = 's32[2]{0}', space=sflag, size = 0x8, scoped, tag = 'scoped memory for tpu_custom_call.1']
    #allocation4 [shape = 's32[2]{0}', space=sflag, size = 0x8, scoped, tag = 'scoped memory for tpu_custom_call.1']
    #allocation5 [shape = 'u8[2048]{0}', space=vmem, size = 0x800, scoped, tag = 'output window, operand 1']
    %10 = vsyncpa [#allocation3], 0
    %s11 = scalar_lea.sflag [#allocation3], 1
    %12 = vsyncpa %s11, 0
    %13 = vsyncpa [#allocation4], 0
    %s14 = scalar_lea.sflag [#allocation4], 1
    %15 = vsyncpa %s14, 0
    loop: start=0, step=1, limit=4
    $region2: #{tpu_custom_call.1} parent=1 // loop_pre_header
      _
    $region3: #{tpu_custom_call.1} parent=1 // loop_header
      %s17 = sphi 0, %s21
      %p18 = scmp.ge.s32.totalorder %s17, 4
      %s27 = sphi 0, %s29
      %s30 = sphi 0, %s27
      %s31 = sphi 0, %s30
      %s47 = sphi 0, %s31
      %s51 = sphi 0, %s51
      %s53 = sphi 0, %s51
      %s54 = sphi 0, %s53
      %s68 = sphi 0, %s54
      %s72 = sphi 0, %s72
      %s74 = sphi 0, %s72
      %s75 = sphi 0, %s74
      %s89 = sphi 0, %s75
      %s95 = sphi 0, %s97
      %s98 = sphi 0, %s95
      %s99 = sphi 0, %s98
      %s115 = sphi 0, %s99
      %s121 = sphi 0, %s123
      %s124 = sphi 0, %s121
      %s125 = sphi 0, %s124
      %s141 = sphi 0, %s125
    $region4: #{tpu_custom_call.1} parent=1 // loop_header_branch
      %20 = sbr.rel (%p18) target = $region8
    $region5: #{tpu_custom_call.1} parent=1 // loop_body
      %s22 = ssub.s32 %s17, 1
      %s23 = ssub.s32 %s17, 2
      %s24 = sadd.s32 %s17, 1
      %s25 = ssub.s32 %s17, %s24
      %p26 = scmp.eq.s32.totalorder %s25, 0
      %s28 = sadd.s32 %s27, 1
      %s29 = scalar_select %p26, %s27, %s28
      %p32 = pneg %p26
      %p33 = scmp.eq.s32.totalorder %s17, 1
      %p34 = por %p32, %p33
      %p35 = scmp.ne.s32.totalorder %s27, %s30
      %p36 = scmp.eq.s32.totalorder %s17, 0
      %p37 = por %p35, %p36
      %p38 = scmp.ne.s32.totalorder %s27, %s30
      %p39 = scmp.eq.s32.totalorder %s22, 1
      %p40 = por %p38, %p39
      %p41 = scmp.ne.s32.totalorder %s30, %s31
      %p42 = scmp.eq.s32.totalorder %s22, 0
      %p43 = por %p41, %p42
      %p44 = scmp.ne.s32.totalorder %s30, %s31
      %p45 = scmp.eq.s32.totalorder %s23, 1
      %p46 = por %p44, %p45
      %p48 = scmp.ne.s32.totalorder %s31, %s47
      %p49 = scmp.eq.s32.totalorder %s23, 0
      %p50 = por %p48, %p49
      %s52 = sadd.s32 %s51, 1
      %p55 = scmp.eq.s32.totalorder %s17, 1
      %p56 = scmp.ne.s32.totalorder %s51, %s53
      %p57 = scmp.eq.s32.totalorder %s17, 0
      %p58 = por %p56, %p57
      %p59 = scmp.ne.s32.totalorder %s51, %s53
      %p60 = scmp.eq.s32.totalorder %s22, 1
      %p61 = por %p59, %p60
      %p62 = scmp.ne.s32.totalorder %s53, %s54
      %p63 = scmp.eq.s32.totalorder %s22, 0
      %p64 = por %p62, %p63
      %p65 = scmp.ne.s32.totalorder %s53, %s54
      %p66 = scmp.eq.s32.totalorder %s23, 1
      %p67 = por %p65, %p66
      %p69 = scmp.ne.s32.totalorder %s54, %s68
      %p70 = scmp.eq.s32.totalorder %s23, 0
      %p71 = por %p69, %p70
      %s73 = sadd.s32 %s72, 1
      %p76 = scmp.eq.s32.totalorder %s17, 1
      %p77 = scmp.ne.s32.totalorder %s72, %s74
      %p78 = scmp.eq.s32.totalorder %s17, 0
      %p79 = por %p77, %p78
      %p80 = scmp.ne.s32.totalorder %s72, %s74
      %p81 = scmp.eq.s32.totalorder %s22, 1
      %p82 = por %p80, %p81
      %p83 = scmp.ne.s32.totalorder %s74, %s75
      %p84 = scmp.eq.s32.totalorder %s22, 0
      %p85 = por %p83, %p84
      %p86 = scmp.ne.s32.totalorder %s74, %s75
      %p87 = scmp.eq.s32.totalorder %s23, 1
      %p88 = por %p86, %p87
      %p90 = scmp.ne.s32.totalorder %s75, %s89
      %p91 = scmp.eq.s32.totalorder %s23, 0
      %p92 = por %p90, %p91
      %s93 = ssub.s32 %s17, %s24
      %p94 = scmp.eq.s32.totalorder %s93, 0
      %s96 = sadd.s32 %s95, 1
      %s97 = scalar_select %p94, %s95, %s96
      %p100 = pneg %p94
      %p101 = scmp.eq.s32.totalorder %s17, 1
      %p102 = por %p100, %p101
      %p103 = scmp.ne.s32.totalorder %s95, %s98
      %p104 = scmp.eq.s32.totalorder %s17, 0
      %p105 = por %p103, %p104
      %p106 = scmp.ne.s32.totalorder %s95, %s98
      %p107 = scmp.eq.s32.totalorder %s22, 1
      %p108 = por %p106, %p107
      %p109 = scmp.ne.s32.totalorder %s98, %s99
      %p110 = scmp.eq.s32.totalorder %s22, 0
      %p111 = por %p109, %p110
      %p112 = scmp.ne.s32.totalorder %s98, %s99
      %p113 = scmp.eq.s32.totalorder %s23, 1
      %p114 = por %p112, %p113
      %p116 = scmp.ne.s32.totalorder %s99, %s115
      %p117 = scmp.eq.s32.totalorder %s23, 0
      %p118 = por %p116, %p117
      %s119 = ssub.s32 %s17, %s24
      %p120 = scmp.eq.s32.totalorder %s119, 0
      %s122 = sadd.s32 %s121, 1
      %s123 = scalar_select %p120, %s121, %s122
      %p126 = pneg %p120
      %p127 = scmp.eq.s32.totalorder %s17, 1
      %p128 = por %p126, %p127
      %p129 = scmp.ne.s32.totalorder %s121, %s124
      %p130 = scmp.eq.s32.totalorder %s17, 0
      %p131 = por %p129, %p130
      %p132 = scmp.ne.s32.totalorder %s121, %s124
      %p133 = scmp.eq.s32.totalorder %s22, 1
      %p134 = por %p132, %p133
      %p135 = scmp.ne.s32.totalorder %s124, %s125
      %p136 = scmp.eq.s32.totalorder %s22, 0
      %p137 = por %p135, %p136
      %p138 = scmp.ne.s32.totalorder %s124, %s125
      %p139 = scmp.eq.s32.totalorder %s23, 1
      %p140 = por %p138, %p139
      %p142 = scmp.ne.s32.totalorder %s125, %s141
      %p143 = scmp.eq.s32.totalorder %s23, 0
      %p144 = por %p142, %p143
      %p145 = scmp.le.s32.totalorder 1, %s17
      %p146 = scmp.lt.s32.totalorder %s17, 3
      %p147 = pnand %p145, %p146
      %p148 = pneg %p147
      // Predicated region
      $region9: #{tpu_custom_call.1} parent=5 // pred_check
        _
      $region10: #{tpu_custom_call.1} parent=5 // pred_check_branch
        %150 = sbr.rel (%p147) target = $region12
      $region11: #{tpu_custom_call.1} parent=5 // pred_region
        %s151 = ssub.s32 %s17, 1
        // Predicated region
        $region13: #{tpu_custom_call.1} parent=11 // pred_check
          %p152 = pneg %p64
        $region14: #{tpu_custom_call.1} parent=11 // pred_check_branch
          %154 = sbr.rel (%p152) target = $region16
        $region15: #{tpu_custom_call.1} parent=11 // pred_region
          _
        $region16: #{tpu_custom_call.1} parent=11 // pred_fallthru
          _
        // Predicated region
        $region17: #{tpu_custom_call.1} parent=11 // pred_check
          %p155 = pneg %p85
        $region18: #{tpu_custom_call.1} parent=11 // pred_check_branch
          %157 = sbr.rel (%p155) target = $region20
        $region19: #{tpu_custom_call.1} parent=11 // pred_region
          _
        $region20: #{tpu_custom_call.1} parent=11 // pred_fallthru
          _
      $region12: #{tpu_custom_call.1} parent=5 // pred_fallthru
        _
      %p158 = scmp.lt.s32.totalorder %s17, 2
      // Predicated region
      $region21: #{tpu_custom_call.1} parent=5 // pred_check
        %p159 = pneg %p158
      $region22: #{tpu_custom_call.1} parent=5 // pred_check_branch
        %161 = sbr.rel (%p159) target = $region24
      $region23: #{tpu_custom_call.1} parent=5 // pred_region
        // Predicated region
        $region25: #{tpu_custom_call.1} parent=23 // pred_check
          %p162 = pneg %p37
        $region26: #{tpu_custom_call.1} parent=23 // pred_check_branch
          %164 = sbr.rel (%p162) target = $region28
        $region27: #{tpu_custom_call.1} parent=23 // pred_region
          %s165 = sand.u32 %s27, 1
          %s166 = scalar_lea.sflag [#allocation3], %s165
          %s167 = sand.u32 %s27, 1
          %s168 = smul.addr %s167, 512
          %s169 = scalar_lea.vmem [#allocation2], %s168
          %s170 = smul.u32 16, %s17
          %172 = vsyncadd %s166, 0
          %s173 = smul.addr %s170, 8
          %s174 = smul.addr %s173, 4
          %s175 = scalar_lea.hbm %s0, %s174
          %s176 = sshll.u32 %s175, 4
          %s177 = int_to_ptr.hbm [resolvable:$true] %s176
          %s178 = sshll.u32 %s169, 4
          %s179 = int_to_ptr.vmem [resolvable:$true] %s178
          %184 = dma.hbm_to_vmem [thread:$0]  %s177, 8192, %s179, %s166, 512, 512, 32
        $region28: #{tpu_custom_call.1} parent=23 // pred_fallthru
          _
      $region24: #{tpu_custom_call.1} parent=5 // pred_fallthru
        _
      %p185 = scmp.le.s32.totalorder 1, %s17
      %p186 = scmp.lt.s32.totalorder %s17, 3
      %p187 = pnand %p185, %p186
      %p188 = pneg %p187
      // Predicated region
      $region29: #{tpu_custom_call.1} parent=5 // pred_check
        _
      $region30: #{tpu_custom_call.1} parent=5 // pred_check_branch
        %190 = sbr.rel (%p187) target = $region32
      $region31: #{tpu_custom_call.1} parent=5 // pred_region
        %s191 = ssub.s32 %s17, 1
        %s192 = sand.u32 %s30, 1
        %s193 = scalar_lea.sflag [#allocation3], %s192
        %s194 = sand.u32 %s30, 1
        %s195 = smul.addr %s194, 512
        %s196 = scalar_lea.vmem [#allocation2], %s195
        // Predicated region
        $region33: #{tpu_custom_call.1} parent=31 // pred_check
          %p197 = pneg %p43
        $region34: #{tpu_custom_call.1} parent=31 // pred_check_branch
          %199 = sbr.rel (%p197) target = $region36
        $region35: #{tpu_custom_call.1} parent=31 // pred_region
          %201 = dma.done %s193, 8192
        $region36: #{tpu_custom_call.1} parent=31 // pred_fallthru
          _
        %s202 = sand.u32 %s30, 1
        %s203 = scalar_lea.sflag [#allocation3], %s202
        %s204 = sand.u32 %s30, 1
        %s205 = smul.addr %s204, 512
        %s206 = scalar_lea.vmem [#allocation2], %s205
        %p207 = pneg %p43
        %p208 = pneg %p40
        %p209 = pneg %p64
        %p210 = pneg %p61
        %p211 = pneg %p85
        %p212 = pneg %p82
        %p213 = pneg %p111
        %p214 = pneg %p108
        %s215 = smul.u32 16, %s22
        %p216 = scmp.lt.s32.totalorder %s215, 31
        %s217 = scalar_select %p216, %s215, 31
        %s218 = smul.addr %s217, 8
        %s219 = scalar_lea.vmem %s3, %s218
        %p220 = pneg %p137
        %p221 = pneg %p134
        %s222 = sand.u32 %s124, 1
        %s223 = scalar_lea.sflag [#allocation4], %s222
        %s224 = sand.u32 %s124, 1
        %s225 = smul.addr %s224, 2
        %s226 = scalar_lea.vmem [#allocation5], %s225
        %s227 = smul.u32 16, %s22
        %s228 = smul.u32 16, %s22
        %p229 = scmp.lt.s32.totalorder %s228, 31
        %s230 = scalar_select %p229, %s228, 31
        %s231 = smul.addr %s230, 8
        %s232 = scalar_lea.vmem %s3, %s231
        %s233 = smul.u32 16, %s22
        %v234 = vld [vmem:[%s196] sm:$0xff]
        %v235 = vld [vmem:[%s196 + $0x8] sm:$0xff]
        %v236 = vld [vmem:[%s196 + $0x10] sm:$0xff]
        %v237 = vld [vmem:[%s196 + $0x18] sm:$0xff]
        %v238 = vld [vmem:[%s196 + $0x20] sm:$0xff]
        %v239 = vld [vmem:[%s196 + $0x28] sm:$0xff]
        %v240 = vld [vmem:[%s196 + $0x30] sm:$0xff]
        %v241 = vld [vmem:[%s196 + $0x38] sm:$0xff]
        %v242 = vld [vmem:[%s196 + $0x40] sm:$0xff]
        %v243 = vld [vmem:[%s196 + $0x48] sm:$0xff]
        %v244 = vld [vmem:[%s196 + $0x50] sm:$0xff]
        %v245 = vld [vmem:[%s196 + $0x58] sm:$0xff]
        %v246 = vld [vmem:[%s196 + $0x60] sm:$0xff]
        %v247 = vld [vmem:[%s196 + $0x68] sm:$0xff]
        %v248 = vld [vmem:[%s196 + $0x70] sm:$0xff]
        %v249 = vld [vmem:[%s196 + $0x78] sm:$0xff]
        %v250 = vld [vmem:[%s196 + $0x80] sm:$0xff]
        %v251 = vld [vmem:[%s196 + $0x88] sm:$0xff]
        %v252 = vld [vmem:[%s196 + $0x90] sm:$0xff]
        %v253 = vld [vmem:[%s196 + $0x98] sm:$0xff]
        %v254 = vld [vmem:[%s196 + $0xa0] sm:$0xff]
        %v255 = vld [vmem:[%s196 + $0xa8] sm:$0xff]
        %v256 = vld [vmem:[%s196 + $0xb0] sm:$0xff]
        %v257 = vld [vmem:[%s196 + $0xb8] sm:$0xff]
        %v258 = vld [vmem:[%s196 + $0xc0] sm:$0xff]
        %v259 = vld [vmem:[%s196 + $0xc8] sm:$0xff]
        %v260 = vld [vmem:[%s196 + $0xd0] sm:$0xff]
        %v261 = vld [vmem:[%s196 + $0xd8] sm:$0xff]
        %v262 = vld [vmem:[%s196 + $0xe0] sm:$0xff]
        %v263 = vld [vmem:[%s196 + $0xe8] sm:$0xff]
        %v264 = vld [vmem:[%s196 + $0xf0] sm:$0xff]
        %v265 = vld [vmem:[%s196 + $0xf8] sm:$0xff]
        %v266 = vld [vmem:[%s196 + $0x100] sm:$0xff]
        %v267 = vld [vmem:[%s196 + $0x108] sm:$0xff]
        %v268 = vld [vmem:[%s196 + $0x110] sm:$0xff]
        %v269 = vld [vmem:[%s196 + $0x118] sm:$0xff]
        %v270 = vld [vmem:[%s196 + $0x120] sm:$0xff]
        %v271 = vld [vmem:[%s196 + $0x128] sm:$0xff]
        %v272 = vld [vmem:[%s196 + $0x130] sm:$0xff]
        %v273 = vld [vmem:[%s196 + $0x138] sm:$0xff]
        %v274 = vld [vmem:[%s196 + $0x140] sm:$0xff]
        %v275 = vld [vmem:[%s196 + $0x148] sm:$0xff]
        %v276 = vld [vmem:[%s196 + $0x150] sm:$0xff]
        %v277 = vld [vmem:[%s196 + $0x158] sm:$0xff]
        %v278 = vld [vmem:[%s196 + $0x160] sm:$0xff]
        %v279 = vld [vmem:[%s196 + $0x168] sm:$0xff]
        %v280 = vld [vmem:[%s196 + $0x170] sm:$0xff]
        %v281 = vld [vmem:[%s196 + $0x178] sm:$0xff]
        %v282 = vld [vmem:[%s196 + $0x180] sm:$0xff]
        %v283 = vld [vmem:[%s196 + $0x188] sm:$0xff]
        %v284 = vld [vmem:[%s196 + $0x190] sm:$0xff]
        %v285 = vld [vmem:[%s196 + $0x198] sm:$0xff]
        %v286 = vld [vmem:[%s196 + $0x1a0] sm:$0xff]
        %v287 = vld [vmem:[%s196 + $0x1a8] sm:$0xff]
        %v288 = vld [vmem:[%s196 + $0x1b0] sm:$0xff]
        %v289 = vld [vmem:[%s196 + $0x1b8] sm:$0xff]
        %v290 = vld [vmem:[%s196 + $0x1c0] sm:$0xff]
        %v291 = vld [vmem:[%s196 + $0x1c8] sm:$0xff]
        %v292 = vld [vmem:[%s196 + $0x1d0] sm:$0xff]
        %v293 = vld [vmem:[%s196 + $0x1d8] sm:$0xff]
        %v294 = vld [vmem:[%s196 + $0x1e0] sm:$0xff]
        %v295 = vld [vmem:[%s196 + $0x1e8] sm:$0xff]
        %v296 = vld [vmem:[%s196 + $0x1f0] sm:$0xff]
        %v297 = vld [vmem:[%s196 + $0x1f8] sm:$0xff]
        %v298 = vld [vmem:[%s1] sm:$0xf]
        %v299 = vld [vmem:[%s1 + $0x4] sm:$0xf]
        %v300 = vld [vmem:[%s1 + $0x8] sm:$0xf]
        %v301 = vld [vmem:[%s1 + $0xc] sm:$0xf]
        %v302 = vld [vmem:[%s1 + $0x10] sm:$0xf]
        %v303 = vld [vmem:[%s1 + $0x14] sm:$0xf]
        %v304 = vld [vmem:[%s1 + $0x18] sm:$0xf]
        %v305 = vld [vmem:[%s1 + $0x1c] sm:$0xf]
        %v306 = vld [vmem:[%s1 + $0x20] sm:$0xf]
        %v307 = vld [vmem:[%s1 + $0x24] sm:$0xf]
        %v308 = vld [vmem:[%s1 + $0x28] sm:$0xf]
        %v309 = vld [vmem:[%s1 + $0x2c] sm:$0xf]
        %v310 = vld [vmem:[%s1 + $0x30] sm:$0xf]
        %v311 = vld [vmem:[%s1 + $0x34] sm:$0xf]
        %v312 = vld [vmem:[%s1 + $0x38] sm:$0xf]
        %v313 = vld [vmem:[%s1 + $0x3c] sm:$0xf]
        %v314 = vld [vmem:[%s1 + $0x40] sm:$0xf]
        %v315 = vld [vmem:[%s1 + $0x44] sm:$0xf]
        %v316 = vld [vmem:[%s1 + $0x48] sm:$0xf]
        %v317 = vld [vmem:[%s1 + $0x4c] sm:$0xf]
        %v318 = vld [vmem:[%s1 + $0x50] sm:$0xf]
        %v319 = vld [vmem:[%s1 + $0x54] sm:$0xf]
        %v320 = vld [vmem:[%s1 + $0x58] sm:$0xf]
        %v321 = vld [vmem:[%s1 + $0x5c] sm:$0xf]
        %v322 = vld [vmem:[%s1 + $0x60] sm:$0xf]
        %v323 = vld [vmem:[%s1 + $0x64] sm:$0xf]
        %v324 = vld [vmem:[%s1 + $0x68] sm:$0xf]
        %v325 = vld [vmem:[%s1 + $0x6c] sm:$0xf]
        %v326 = vld [vmem:[%s1 + $0x70] sm:$0xf]
        %v327 = vld [vmem:[%s1 + $0x74] sm:$0xf]
        %v328 = vld [vmem:[%s1 + $0x78] sm:$0xf]
        %v329 = vld [vmem:[%s1 + $0x7c] sm:$0xf]
        %v330 = vld [vmem:[%s1 + $0x80] sm:$0xf]
        %v331 = vld [vmem:[%s1 + $0x84] sm:$0xf]
        %v332 = vld [vmem:[%s1 + $0x88] sm:$0xf]
        %v333 = vld [vmem:[%s1 + $0x8c] sm:$0xf]
        %v334 = vld [vmem:[%s1 + $0x90] sm:$0xf]
        %v335 = vld [vmem:[%s1 + $0x94] sm:$0xf]
        %v336 = vld [vmem:[%s1 + $0x98] sm:$0xf]
        %v337 = vld [vmem:[%s1 + $0x9c] sm:$0xf]
        %v338 = vld [vmem:[%s1 + $0xa0] sm:$0xf]
        %v339 = vld [vmem:[%s1 + $0xa4] sm:$0xf]
        %v340 = vld [vmem:[%s1 + $0xa8] sm:$0xf]
        %v341 = vld [vmem:[%s1 + $0xac] sm:$0xf]
        %v342 = vld [vmem:[%s1 + $0xb0] sm:$0xf]
        %v343 = vld [vmem:[%s1 + $0xb4] sm:$0xf]
        %v344 = vld [vmem:[%s1 + $0xb8] sm:$0xf]
        %v345 = vld [vmem:[%s1 + $0xbc] sm:$0xf]
        %v346 = vld [vmem:[%s1 + $0xc0] sm:$0xf]
        %v347 = vld [vmem:[%s1 + $0xc4] sm:$0xf]
        %v348 = vld [vmem:[%s1 + $0xc8] sm:$0xf]
        %v349 = vld [vmem:[%s1 + $0xcc] sm:$0xf]
        %v350 = vld [vmem:[%s1 + $0xd0] sm:$0xf]
        %v351 = vld [vmem:[%s1 + $0xd4] sm:$0xf]
        %v352 = vld [vmem:[%s1 + $0xd8] sm:$0xf]
        %v353 = vld [vmem:[%s1 + $0xdc] sm:$0xf]
        %v354 = vld [vmem:[%s1 + $0xe0] sm:$0xf]
        %v355 = vld [vmem:[%s1 + $0xe4] sm:$0xf]
        %v356 = vld [vmem:[%s1 + $0xe8] sm:$0xf]
        %v357 = vld [vmem:[%s1 + $0xec] sm:$0xf]
        %v358 = vld [vmem:[%s1 + $0xf0] sm:$0xf]
        %v359 = vld [vmem:[%s1 + $0xf4] sm:$0xf]
        %v360 = vld [vmem:[%s1 + $0xf8] sm:$0xf]
        %v361 = vld [vmem:[%s1 + $0xfc] sm:$0xf]
        %v362 = vld [vmem:[%s1 + $0x100] sm:$0xf]
        %v363 = vld [vmem:[%s1 + $0x104] sm:$0xf]
        %v364 = vld [vmem:[%s1 + $0x108] sm:$0xf]
        %v365 = vld [vmem:[%s1 + $0x10c] sm:$0xf]
        %v366 = vld [vmem:[%s1 + $0x110] sm:$0xf]
        %v367 = vld [vmem:[%s1 + $0x114] sm:$0xf]
        %v368 = vld [vmem:[%s1 + $0x118] sm:$0xf]
        %v369 = vld [vmem:[%s1 + $0x11c] sm:$0xf]
        %v370 = vld [vmem:[%s1 + $0x120] sm:$0xf]
        %v371 = vld [vmem:[%s1 + $0x124] sm:$0xf]
        %v372 = vld [vmem:[%s1 + $0x128] sm:$0xf]
        %v373 = vld [vmem:[%s1 + $0x12c] sm:$0xf]
        %v374 = vld [vmem:[%s1 + $0x130] sm:$0xf]
        %v375 = vld [vmem:[%s1 + $0x134] sm:$0xf]
        %v376 = vld [vmem:[%s1 + $0x138] sm:$0xf]
        %v377 = vld [vmem:[%s1 + $0x13c] sm:$0xf]
        %v378 = vld [vmem:[%s1 + $0x140] sm:$0xf]
        %v379 = vld [vmem:[%s1 + $0x144] sm:$0xf]
        %v380 = vld [vmem:[%s1 + $0x148] sm:$0xf]
        %v381 = vld [vmem:[%s1 + $0x14c] sm:$0xf]
        %v382 = vld [vmem:[%s1 + $0x150] sm:$0xf]
        %v383 = vld [vmem:[%s1 + $0x154] sm:$0xf]
        %v384 = vld [vmem:[%s1 + $0x158] sm:$0xf]
        %v385 = vld [vmem:[%s1 + $0x15c] sm:$0xf]
        %v386 = vld [vmem:[%s1 + $0x160] sm:$0xf]
        %v387 = vld [vmem:[%s1 + $0x164] sm:$0xf]
        %v388 = vld [vmem:[%s1 + $0x168] sm:$0xf]
        %v389 = vld [vmem:[%s1 + $0x16c] sm:$0xf]
        %v390 = vld [vmem:[%s1 + $0x170] sm:$0xf]
        %v391 = vld [vmem:[%s1 + $0x174] sm:$0xf]
        %v392 = vld [vmem:[%s1 + $0x178] sm:$0xf]
        %v393 = vld [vmem:[%s1 + $0x17c] sm:$0xf]
        %v394 = vld [vmem:[%s1 + $0x180] sm:$0xf]
        %v395 = vld [vmem:[%s1 + $0x184] sm:$0xf]
        %v396 = vld [vmem:[%s1 + $0x188] sm:$0xf]
        %v397 = vld [vmem:[%s1 + $0x18c] sm:$0xf]
        %v398 = vld [vmem:[%s1 + $0x190] sm:$0xf]
        %v399 = vld [vmem:[%s1 + $0x194] sm:$0xf]
        %v400 = vld [vmem:[%s1 + $0x198] sm:$0xf]
        %v401 = vld [vmem:[%s1 + $0x19c] sm:$0xf]
        %v402 = vld [vmem:[%s1 + $0x1a0] sm:$0xf]
        %v403 = vld [vmem:[%s1 + $0x1a4] sm:$0xf]
        %v404 = vld [vmem:[%s1 + $0x1a8] sm:$0xf]
        %v405 = vld [vmem:[%s1 + $0x1ac] sm:$0xf]
        %v406 = vld [vmem:[%s1 + $0x1b0] sm:$0xf]
        %v407 = vld [vmem:[%s1 + $0x1b4] sm:$0xf]
        %v408 = vld [vmem:[%s1 + $0x1b8] sm:$0xf]
        %v409 = vld [vmem:[%s1 + $0x1bc] sm:$0xf]
        %v410 = vld [vmem:[%s1 + $0x1c0] sm:$0xf]
        %v411 = vld [vmem:[%s1 + $0x1c4] sm:$0xf]
        %v412 = vld [vmem:[%s1 + $0x1c8] sm:$0xf]
        %v413 = vld [vmem:[%s1 + $0x1cc] sm:$0xf]
        %v414 = vld [vmem:[%s1 + $0x1d0] sm:$0xf]
        %v415 = vld [vmem:[%s1 + $0x1d4] sm:$0xf]
        %v416 = vld [vmem:[%s1 + $0x1d8] sm:$0xf]
        %v417 = vld [vmem:[%s1 + $0x1dc] sm:$0xf]
        %v418 = vld [vmem:[%s1 + $0x1e0] sm:$0xf]
        %v419 = vld [vmem:[%s1 + $0x1e4] sm:$0xf]
        %v420 = vld [vmem:[%s1 + $0x1e8] sm:$0xf]
        %v421 = vld [vmem:[%s1 + $0x1ec] sm:$0xf]
        %v422 = vld [vmem:[%s1 + $0x1f0] sm:$0xf]
        %v423 = vld [vmem:[%s1 + $0x1f4] sm:$0xf]
        %v424 = vld [vmem:[%s1 + $0x1f8] sm:$0xf]
        %v425 = vld [vmem:[%s1 + $0x1fc] sm:$0xf]
        %v426 = vld [vmem:[%s2] sm:$0x1]
        %v428 = vperm.slane %v426, 0
        %v494 = vunpack.c.l.b16 %v234
        %v495 = vunpack.c.h.b16 %v234
        %v496 = vunpack.c.l.b16 %v235
        %v497 = vunpack.c.h.b16 %v235
        %v498 = vunpack.c.l.b16 %v236
        %v499 = vunpack.c.h.b16 %v236
        %v500 = vunpack.c.l.b16 %v237
        %v501 = vunpack.c.h.b16 %v237
        %v502 = vunpack.c.l.b16 %v238
        %v503 = vunpack.c.h.b16 %v238
        %v504 = vunpack.c.l.b16 %v239
        %v505 = vunpack.c.h.b16 %v239
        %v506 = vunpack.c.l.b16 %v240
        %v507 = vunpack.c.h.b16 %v240
        %v508 = vunpack.c.l.b16 %v241
        %v509 = vunpack.c.h.b16 %v241
        %v510 = vunpack.c.l.b16 %v242
        %v511 = vunpack.c.h.b16 %v242
        %v512 = vunpack.c.l.b16 %v243
        %v513 = vunpack.c.h.b16 %v243
        %v514 = vunpack.c.l.b16 %v244
        %v515 = vunpack.c.h.b16 %v244
        %v516 = vunpack.c.l.b16 %v245
        %v517 = vunpack.c.h.b16 %v245
        %v518 = vunpack.c.l.b16 %v246
        %v519 = vunpack.c.h.b16 %v246
        %v520 = vunpack.c.l.b16 %v247
        %v521 = vunpack.c.h.b16 %v247
        %v522 = vunpack.c.l.b16 %v248
        %v523 = vunpack.c.h.b16 %v248
        %v524 = vunpack.c.l.b16 %v249
        %v525 = vunpack.c.h.b16 %v249
        %v526 = vunpack.c.l.b16 %v250
        %v527 = vunpack.c.h.b16 %v250
        %v528 = vunpack.c.l.b16 %v251
        %v529 = vunpack.c.h.b16 %v251
        %v530 = vunpack.c.l.b16 %v252
        %v531 = vunpack.c.h.b16 %v252
        %v532 = vunpack.c.l.b16 %v253
        %v533 = vunpack.c.h.b16 %v253
        %v534 = vunpack.c.l.b16 %v254
        %v535 = vunpack.c.h.b16 %v254
        %v536 = vunpack.c.l.b16 %v255
        %v537 = vunpack.c.h.b16 %v255
        %v538 = vunpack.c.l.b16 %v256
        %v539 = vunpack.c.h.b16 %v256
        %v540 = vunpack.c.l.b16 %v257
        %v541 = vunpack.c.h.b16 %v257
        %v542 = vunpack.c.l.b16 %v258
        %v543 = vunpack.c.h.b16 %v258
        %v544 = vunpack.c.l.b16 %v259
        %v545 = vunpack.c.h.b16 %v259
        %v546 = vunpack.c.l.b16 %v260
        %v547 = vunpack.c.h.b16 %v260
        %v548 = vunpack.c.l.b16 %v261
        %v549 = vunpack.c.h.b16 %v261
        %v550 = vunpack.c.l.b16 %v262
        %v551 = vunpack.c.h.b16 %v262
        %v552 = vunpack.c.l.b16 %v263
        %v553 = vunpack.c.h.b16 %v263
        %v554 = vunpack.c.l.b16 %v264
        %v555 = vunpack.c.h.b16 %v264
        %v556 = vunpack.c.l.b16 %v265
        %v557 = vunpack.c.h.b16 %v265
        %v558 = vunpack.c.l.b16 %v266
        %v559 = vunpack.c.h.b16 %v266
        %v560 = vunpack.c.l.b16 %v267
        %v561 = vunpack.c.h.b16 %v267
        %v562 = vunpack.c.l.b16 %v268
        %v563 = vunpack.c.h.b16 %v268
        %v564 = vunpack.c.l.b16 %v269
        %v565 = vunpack.c.h.b16 %v269
        %v566 = vunpack.c.l.b16 %v270
        %v567 = vunpack.c.h.b16 %v270
        %v568 = vunpack.c.l.b16 %v271
        %v569 = vunpack.c.h.b16 %v271
        %v570 = vunpack.c.l.b16 %v272
        %v571 = vunpack.c.h.b16 %v272
        %v572 = vunpack.c.l.b16 %v273
        %v573 = vunpack.c.h.b16 %v273
        %v574 = vunpack.c.l.b16 %v274
        %v575 = vunpack.c.h.b16 %v274
        %v576 = vunpack.c.l.b16 %v275
        %v577 = vunpack.c.h.b16 %v275
        %v578 = vunpack.c.l.b16 %v276
        %v579 = vunpack.c.h.b16 %v276
        %v580 = vunpack.c.l.b16 %v277
        %v581 = vunpack.c.h.b16 %v277
        %v582 = vunpack.c.l.b16 %v278
        %v583 = vunpack.c.h.b16 %v278
        %v584 = vunpack.c.l.b16 %v279
        %v585 = vunpack.c.h.b16 %v279
        %v586 = vunpack.c.l.b16 %v280
        %v587 = vunpack.c.h.b16 %v280
        %v588 = vunpack.c.l.b16 %v281
        %v589 = vunpack.c.h.b16 %v281
        %v590 = vunpack.c.l.b16 %v282
        %v591 = vunpack.c.h.b16 %v282
        %v592 = vunpack.c.l.b16 %v283
        %v593 = vunpack.c.h.b16 %v283
        %v594 = vunpack.c.l.b16 %v284
        %v595 = vunpack.c.h.b16 %v284
        %v596 = vunpack.c.l.b16 %v285
        %v597 = vunpack.c.h.b16 %v285
        %v598 = vunpack.c.l.b16 %v286
        %v599 = vunpack.c.h.b16 %v286
        %v600 = vunpack.c.l.b16 %v287
        %v601 = vunpack.c.h.b16 %v287
        %v602 = vunpack.c.l.b16 %v288
        %v603 = vunpack.c.h.b16 %v288
        %v604 = vunpack.c.l.b16 %v289
        %v605 = vunpack.c.h.b16 %v289
        %v606 = vunpack.c.l.b16 %v290
        %v607 = vunpack.c.h.b16 %v290
        %v608 = vunpack.c.l.b16 %v291
        %v609 = vunpack.c.h.b16 %v291
        %v610 = vunpack.c.l.b16 %v292
        %v611 = vunpack.c.h.b16 %v292
        %v612 = vunpack.c.l.b16 %v293
        %v613 = vunpack.c.h.b16 %v293
        %v614 = vunpack.c.l.b16 %v294
        %v615 = vunpack.c.h.b16 %v294
        %v616 = vunpack.c.l.b16 %v295
        %v617 = vunpack.c.h.b16 %v295
        %v618 = vunpack.c.l.b16 %v296
        %v619 = vunpack.c.h.b16 %v296
        %v620 = vunpack.c.l.b16 %v297
        %v621 = vunpack.c.h.b16 %v297
        %v622 = vpack.c.b16 %v502, %v494
        %v623 = vpack.c.b16 %v503, %v495
        %v624 = vpack.c.b16 %v504, %v496
        %v625 = vpack.c.b16 %v505, %v497
        %v626 = vpack.c.b16 %v506, %v498
        %v627 = vpack.c.b16 %v507, %v499
        %v628 = vpack.c.b16 %v508, %v500
        %v629 = vpack.c.b16 %v509, %v501
        %v630 = vpack.c.b16 %v518, %v510
        %v631 = vpack.c.b16 %v519, %v511
        %v632 = vpack.c.b16 %v520, %v512
        %v633 = vpack.c.b16 %v521, %v513
        %v634 = vpack.c.b16 %v522, %v514
        %v635 = vpack.c.b16 %v523, %v515
        %v636 = vpack.c.b16 %v524, %v516
        %v637 = vpack.c.b16 %v525, %v517
        %v638 = vpack.c.b16 %v534, %v526
        %v639 = vpack.c.b16 %v535, %v527
        %v640 = vpack.c.b16 %v536, %v528
        %v641 = vpack.c.b16 %v537, %v529
        %v642 = vpack.c.b16 %v538, %v530
        %v643 = vpack.c.b16 %v539, %v531
        %v644 = vpack.c.b16 %v540, %v532
        %v645 = vpack.c.b16 %v541, %v533
        %v646 = vpack.c.b16 %v550, %v542
        %v647 = vpack.c.b16 %v551, %v543
        %v648 = vpack.c.b16 %v552, %v544
        %v649 = vpack.c.b16 %v553, %v545
        %v650 = vpack.c.b16 %v554, %v546
        %v651 = vpack.c.b16 %v555, %v547
        %v652 = vpack.c.b16 %v556, %v548
        %v653 = vpack.c.b16 %v557, %v549
        %v654 = vpack.c.b16 %v566, %v558
        %v655 = vpack.c.b16 %v567, %v559
        %v656 = vpack.c.b16 %v568, %v560
        %v657 = vpack.c.b16 %v569, %v561
        %v658 = vpack.c.b16 %v570, %v562
        %v659 = vpack.c.b16 %v571, %v563
        %v660 = vpack.c.b16 %v572, %v564
        %v661 = vpack.c.b16 %v573, %v565
        %v662 = vpack.c.b16 %v582, %v574
        %v663 = vpack.c.b16 %v583, %v575
        %v664 = vpack.c.b16 %v584, %v576
        %v665 = vpack.c.b16 %v585, %v577
        %v666 = vpack.c.b16 %v586, %v578
        %v667 = vpack.c.b16 %v587, %v579
        %v668 = vpack.c.b16 %v588, %v580
        %v669 = vpack.c.b16 %v589, %v581
        %v670 = vpack.c.b16 %v598, %v590
        %v671 = vpack.c.b16 %v599, %v591
        %v672 = vpack.c.b16 %v600, %v592
        %v673 = vpack.c.b16 %v601, %v593
        %v674 = vpack.c.b16 %v602, %v594
        %v675 = vpack.c.b16 %v603, %v595
        %v676 = vpack.c.b16 %v604, %v596
        %v677 = vpack.c.b16 %v605, %v597
        %v678 = vpack.c.b16 %v614, %v606
        %v679 = vpack.c.b16 %v615, %v607
        %v680 = vpack.c.b16 %v616, %v608
        %v681 = vpack.c.b16 %v617, %v609
        %v682 = vpack.c.b16 %v618, %v610
        %v683 = vpack.c.b16 %v619, %v611
        %v684 = vpack.c.b16 %v620, %v612
        %v685 = vpack.c.b16 %v621, %v613
        %v878 = vunpack.c.l.b16 %v298
        %v879 = vunpack.c.l.b16 %v299
        %v880 = vunpack.c.l.b16 %v300
        %v881 = vunpack.c.l.b16 %v301
        %v882 = vunpack.c.l.b16 %v302
        %v883 = vunpack.c.l.b16 %v303
        %v884 = vunpack.c.l.b16 %v304
        %v885 = vunpack.c.l.b16 %v305
        %v886 = vunpack.c.l.b16 %v306
        %v887 = vunpack.c.l.b16 %v307
        %v888 = vunpack.c.l.b16 %v308
        %v889 = vunpack.c.l.b16 %v309
        %v890 = vunpack.c.l.b16 %v310
        %v891 = vunpack.c.l.b16 %v311
        %v892 = vunpack.c.l.b16 %v312
        %v893 = vunpack.c.l.b16 %v313
        %v894 = vunpack.c.l.b16 %v314
        %v895 = vunpack.c.l.b16 %v315
        %v896 = vunpack.c.l.b16 %v316
        %v897 = vunpack.c.l.b16 %v317
        %v898 = vunpack.c.l.b16 %v318
        %v899 = vunpack.c.l.b16 %v319
        %v900 = vunpack.c.l.b16 %v320
        %v901 = vunpack.c.l.b16 %v321
        %v902 = vunpack.c.l.b16 %v322
        %v903 = vunpack.c.l.b16 %v323
        %v904 = vunpack.c.l.b16 %v324
        %v905 = vunpack.c.l.b16 %v325
        %v906 = vunpack.c.l.b16 %v326
        %v907 = vunpack.c.l.b16 %v327
        %v908 = vunpack.c.l.b16 %v328
        %v909 = vunpack.c.l.b16 %v329
        %v910 = vunpack.c.l.b16 %v330
        %v911 = vunpack.c.l.b16 %v331
        %v912 = vunpack.c.l.b16 %v332
        %v913 = vunpack.c.l.b16 %v333
        %v914 = vunpack.c.l.b16 %v334
        %v915 = vunpack.c.l.b16 %v335
        %v916 = vunpack.c.l.b16 %v336
        %v917 = vunpack.c.l.b16 %v337
        %v918 = vunpack.c.l.b16 %v338
        %v919 = vunpack.c.l.b16 %v339
        %v920 = vunpack.c.l.b16 %v340
        %v921 = vunpack.c.l.b16 %v341
        %v922 = vunpack.c.l.b16 %v342
        %v923 = vunpack.c.l.b16 %v343
        %v924 = vunpack.c.l.b16 %v344
        %v925 = vunpack.c.l.b16 %v345
        %v926 = vunpack.c.l.b16 %v346
        %v927 = vunpack.c.l.b16 %v347
        %v928 = vunpack.c.l.b16 %v348
        %v929 = vunpack.c.l.b16 %v349
        %v930 = vunpack.c.l.b16 %v350
        %v931 = vunpack.c.l.b16 %v351
        %v932 = vunpack.c.l.b16 %v352
        %v933 = vunpack.c.l.b16 %v353
        %v934 = vunpack.c.l.b16 %v354
        %v935 = vunpack.c.l.b16 %v355
        %v936 = vunpack.c.l.b16 %v356
        %v937 = vunpack.c.l.b16 %v357
        %v938 = vunpack.c.l.b16 %v358
        %v939 = vunpack.c.l.b16 %v359
        %v940 = vunpack.c.l.b16 %v360
        %v941 = vunpack.c.l.b16 %v361
        %v942 = vunpack.c.l.b16 %v362
        %v943 = vunpack.c.l.b16 %v363
        %v944 = vunpack.c.l.b16 %v364
        %v945 = vunpack.c.l.b16 %v365
        %v946 = vunpack.c.l.b16 %v366
        %v947 = vunpack.c.l.b16 %v367
        %v948 = vunpack.c.l.b16 %v368
        %v949 = vunpack.c.l.b16 %v369
        %v950 = vunpack.c.l.b16 %v370
        %v951 = vunpack.c.l.b16 %v371
        %v952 = vunpack.c.l.b16 %v372
        %v953 = vunpack.c.l.b16 %v373
        %v954 = vunpack.c.l.b16 %v374
        %v955 = vunpack.c.l.b16 %v375
        %v956 = vunpack.c.l.b16 %v376
        %v957 = vunpack.c.l.b16 %v377
        %v958 = vunpack.c.l.b16 %v378
        %v959 = vunpack.c.l.b16 %v379
        %v960 = vunpack.c.l.b16 %v380
        %v961 = vunpack.c.l.b16 %v381
        %v962 = vunpack.c.l.b16 %v382
        %v963 = vunpack.c.l.b16 %v383
        %v964 = vunpack.c.l.b16 %v384
        %v965 = vunpack.c.l.b16 %v385
        %v966 = vunpack.c.l.b16 %v386
        %v967 = vunpack.c.l.b16 %v387
        %v968 = vunpack.c.l.b16 %v388
        %v969 = vunpack.c.l.b16 %v389
        %v970 = vunpack.c.l.b16 %v390
        %v971 = vunpack.c.l.b16 %v391
        %v972 = vunpack.c.l.b16 %v392
        %v973 = vunpack.c.l.b16 %v393
        %v974 = vunpack.c.l.b16 %v394
        %v975 = vunpack.c.l.b16 %v395
        %v976 = vunpack.c.l.b16 %v396
        %v977 = vunpack.c.l.b16 %v397
        %v978 = vunpack.c.l.b16 %v398
        %v979 = vunpack.c.l.b16 %v399
        %v980 = vunpack.c.l.b16 %v400
        %v981 = vunpack.c.l.b16 %v401
        %v982 = vunpack.c.l.b16 %v402
        %v983 = vunpack.c.l.b16 %v403
        %v984 = vunpack.c.l.b16 %v404
        %v985 = vunpack.c.l.b16 %v405
        %v986 = vunpack.c.l.b16 %v406
        %v987 = vunpack.c.l.b16 %v407
        %v988 = vunpack.c.l.b16 %v408
        %v989 = vunpack.c.l.b16 %v409
        %v990 = vunpack.c.l.b16 %v410
        %v991 = vunpack.c.l.b16 %v411
        %v992 = vunpack.c.l.b16 %v412
        %v993 = vunpack.c.l.b16 %v413
        %v994 = vunpack.c.l.b16 %v414
        %v995 = vunpack.c.l.b16 %v415
        %v996 = vunpack.c.l.b16 %v416
        %v997 = vunpack.c.l.b16 %v417
        %v998 = vunpack.c.l.b16 %v418
        %v999 = vunpack.c.l.b16 %v419
        %v1000 = vunpack.c.l.b16 %v420
        %v1001 = vunpack.c.l.b16 %v421
        %v1002 = vunpack.c.l.b16 %v422
        %v1003 = vunpack.c.l.b16 %v423
        %v1004 = vunpack.c.l.b16 %v424
        %v1005 = vunpack.c.l.b16 %v425
        %v1006 = vpack.c.b16 %v879, %v878
        %v1007 = vpack.c.b16 %v881, %v880
        %v1008 = vpack.c.b16 %v883, %v882
        %v1009 = vpack.c.b16 %v885, %v884
        %v1010 = vpack.c.b16 %v887, %v886
        %v1011 = vpack.c.b16 %v889, %v888
        %v1012 = vpack.c.b16 %v891, %v890
        %v1013 = vpack.c.b16 %v893, %v892
        %v1014 = vpack.c.b16 %v895, %v894
        %v1015 = vpack.c.b16 %v897, %v896
        %v1016 = vpack.c.b16 %v899, %v898
        %v1017 = vpack.c.b16 %v901, %v900
        %v1018 = vpack.c.b16 %v903, %v902
        %v1019 = vpack.c.b16 %v905, %v904
        %v1020 = vpack.c.b16 %v907, %v906
        %v1021 = vpack.c.b16 %v909, %v908
        %v1022 = vpack.c.b16 %v911, %v910
        %v1023 = vpack.c.b16 %v913, %v912
        %v1024 = vpack.c.b16 %v915, %v914
        %v1025 = vpack.c.b16 %v917, %v916
        %v1026 = vpack.c.b16 %v919, %v918
        %v1027 = vpack.c.b16 %v921, %v920
        %v1028 = vpack.c.b16 %v923, %v922
        %v1029 = vpack.c.b16 %v925, %v924
        %v1030 = vpack.c.b16 %v927, %v926
        %v1031 = vpack.c.b16 %v929, %v928
        %v1032 = vpack.c.b16 %v931, %v930
        %v1033 = vpack.c.b16 %v933, %v932
        %v1034 = vpack.c.b16 %v935, %v934
        %v1035 = vpack.c.b16 %v937, %v936
        %v1036 = vpack.c.b16 %v939, %v938
        %v1037 = vpack.c.b16 %v941, %v940
        %v1038 = vpack.c.b16 %v943, %v942
        %v1039 = vpack.c.b16 %v945, %v944
        %v1040 = vpack.c.b16 %v947, %v946
        %v1041 = vpack.c.b16 %v949, %v948
        %v1042 = vpack.c.b16 %v951, %v950
        %v1043 = vpack.c.b16 %v953, %v952
        %v1044 = vpack.c.b16 %v955, %v954
        %v1045 = vpack.c.b16 %v957, %v956
        %v1046 = vpack.c.b16 %v959, %v958
        %v1047 = vpack.c.b16 %v961, %v960
        %v1048 = vpack.c.b16 %v963, %v962
        %v1049 = vpack.c.b16 %v965, %v964
        %v1050 = vpack.c.b16 %v967, %v966
        %v1051 = vpack.c.b16 %v969, %v968
        %v1052 = vpack.c.b16 %v971, %v970
        %v1053 = vpack.c.b16 %v973, %v972
        %v1054 = vpack.c.b16 %v975, %v974
        %v1055 = vpack.c.b16 %v977, %v976
        %v1056 = vpack.c.b16 %v979, %v978
        %v1057 = vpack.c.b16 %v981, %v980
        %v1058 = vpack.c.b16 %v983, %v982
        %v1059 = vpack.c.b16 %v985, %v984
        %v1060 = vpack.c.b16 %v987, %v986
        %v1061 = vpack.c.b16 %v989, %v988
        %v1062 = vpack.c.b16 %v991, %v990
        %v1063 = vpack.c.b16 %v993, %v992
        %v1064 = vpack.c.b16 %v995, %v994
        %v1065 = vpack.c.b16 %v997, %v996
        %v1066 = vpack.c.b16 %v999, %v998
        %v1067 = vpack.c.b16 %v1001, %v1000
        %v1068 = vpack.c.b16 %v1003, %v1002
        %v1069 = vpack.c.b16 %v1005, %v1004
        %1134 = vmatpush.bf16.msra.mxu0 %v1013
        %1135 = vmatpush.bf16.msra.mxu0 %v1012
        %1136 = vmatpush.bf16.msra.mxu0 %v1011
        %1137 = vmatpush.bf16.msra.mxu0 %v1010
        %1138 = vmatpush.bf16.msra.mxu0 %v1009
        %1139 = vmatpush.bf16.msra.mxu0 %v1008
        %1140 = vmatpush.bf16.msra.mxu0 %v1007
        %1141 = vmatpush.bf16.msra.mxu0 %v1006
        %1142 = vmatmul.bf16.gmra.mxu0 %v622
        %v1143 = vpop.f32.mrf.mxu0
        %v1144 = vadd.f32 %v428, %v1143
        %v1145 = vpop.f32.mrf.mxu0
        %v1146 = vadd.f32 %v428, %v1145
        %1147 = vmatmul.bf16.gmra.mxu0 %v630
        %v1148 = vpop.f32.mrf.mxu0
        %v1149 = vadd.f32 %v428, %v1148
        %v1150 = vpop.f32.mrf.mxu0
        %v1151 = vadd.f32 %v428, %v1150
        %1152 = vmatmul.bf16.gmra.mxu0 %v638
        %v1153 = vpop.f32.mrf.mxu0
        %v1154 = vadd.f32 %v428, %v1153
        %v1155 = vpop.f32.mrf.mxu0
        %v1156 = vadd.f32 %v428, %v1155
        %1157 = vmatmul.bf16.gmra.mxu0 %v646
        %v1158 = vpop.f32.mrf.mxu0
        %v1159 = vadd.f32 %v428, %v1158
        %v1160 = vpop.f32.mrf.mxu0
        %v1161 = vadd.f32 %v428, %v1160
        %1162 = vmatmul.bf16.gmra.mxu0 %v654
        %v1163 = vpop.f32.mrf.mxu0
        %v1164 = vadd.f32 %v428, %v1163
        %v1165 = vpop.f32.mrf.mxu0
        %v1166 = vadd.f32 %v428, %v1165
        %1167 = vmatmul.bf16.gmra.mxu0 %v662
        %v1168 = vpop.f32.mrf.mxu0
        %v1169 = vadd.f32 %v428, %v1168
        %v1170 = vpop.f32.mrf.mxu0
        %v1171 = vadd.f32 %v428, %v1170
        %1172 = vmatmul.bf16.gmra.mxu0 %v670
        %v1173 = vpop.f32.mrf.mxu0
        %v1174 = vadd.f32 %v428, %v1173
        %v1175 = vpop.f32.mrf.mxu0
        %v1176 = vadd.f32 %v428, %v1175
        %1177 = vmatmul.bf16.gmra.mxu0 %v678
        %v1178 = vpop.f32.mrf.mxu0
        %v1179 = vadd.f32 %v428, %v1178
        %v1180 = vpop.f32.mrf.mxu0
        %v1181 = vadd.f32 %v428, %v1180
        %1182 = vdwg.mxu0
        %1183 = vmatpush.bf16.msra.mxu0 %v1021
        %1184 = vmatpush.bf16.msra.mxu0 %v1020
        %1185 = vmatpush.bf16.msra.mxu0 %v1019
        %1186 = vmatpush.bf16.msra.mxu0 %v1018
        %1187 = vmatpush.bf16.msra.mxu0 %v1017
        %1188 = vmatpush.bf16.msra.mxu0 %v1016
        %1189 = vmatpush.bf16.msra.mxu0 %v1015
        %1190 = vmatpush.bf16.msra.mxu0 %v1014
        %1191 = vmatmul.bf16.gmra.mxu0 %v623
        %v1192 = vpop.f32.mrf.mxu0
        %v1193 = vadd.f32 %v1144, %v1192
        %v1194 = vpop.f32.mrf.mxu0
        %v1195 = vadd.f32 %v1146, %v1194
        %1196 = vmatmul.bf16.gmra.mxu0 %v631
        %v1197 = vpop.f32.mrf.mxu0
        %v1198 = vadd.f32 %v1149, %v1197
        %v1199 = vpop.f32.mrf.mxu0
        %v1200 = vadd.f32 %v1151, %v1199
        %1201 = vmatmul.bf16.gmra.mxu0 %v639
        %v1202 = vpop.f32.mrf.mxu0
        %v1203 = vadd.f32 %v1154, %v1202
        %v1204 = vpop.f32.mrf.mxu0
        %v1205 = vadd.f32 %v1156, %v1204
        %1206 = vmatmul.bf16.gmra.mxu0 %v647
        %v1207 = vpop.f32.mrf.mxu0
        %v1208 = vadd.f32 %v1159, %v1207
        %v1209 = vpop.f32.mrf.mxu0
        %v1210 = vadd.f32 %v1161, %v1209
        %1211 = vmatmul.bf16.gmra.mxu0 %v655
        %v1212 = vpop.f32.mrf.mxu0
        %v1213 = vadd.f32 %v1164, %v1212
        %v1214 = vpop.f32.mrf.mxu0
        %v1215 = vadd.f32 %v1166, %v1214
        %1216 = vmatmul.bf16.gmra.mxu0 %v663
        %v1217 = vpop.f32.mrf.mxu0
        %v1218 = vadd.f32 %v1169, %v1217
        %v1219 = vpop.f32.mrf.mxu0
        %v1220 = vadd.f32 %v1171, %v1219
        %1221 = vmatmul.bf16.gmra.mxu0 %v671
        %v1222 = vpop.f32.mrf.mxu0
        %v1223 = vadd.f32 %v1174, %v1222
        %v1224 = vpop.f32.mrf.mxu0
        %v1225 = vadd.f32 %v1176, %v1224
        %1226 = vmatmul.bf16.gmra.mxu0 %v679
        %v1227 = vpop.f32.mrf.mxu0
        %v1228 = vadd.f32 %v1179, %v1227
        %v1229 = vpop.f32.mrf.mxu0
        %v1230 = vadd.f32 %v1181, %v1229
        %1231 = vdwg.mxu0
        %1232 = vmatpush.bf16.msra.mxu0 %v1029
        %1233 = vmatpush.bf16.msra.mxu0 %v1028
        %1234 = vmatpush.bf16.msra.mxu0 %v1027
        %1235 = vmatpush.bf16.msra.mxu0 %v1026
        %1236 = vmatpush.bf16.msra.mxu0 %v1025
        %1237 = vmatpush.bf16.msra.mxu0 %v1024
        %1238 = vmatpush.bf16.msra.mxu0 %v1023
        %1239 = vmatpush.bf16.msra.mxu0 %v1022
        %1240 = vmatmul.bf16.gmra.mxu0 %v624
        %v1241 = vpop.f32.mrf.mxu0
        %v1242 = vadd.f32 %v1193, %v1241
        %v1243 = vpop.f32.mrf.mxu0
        %v1244 = vadd.f32 %v1195, %v1243
        %1245 = vmatmul.bf16.gmra.mxu0 %v632
        %v1246 = vpop.f32.mrf.mxu0
        %v1247 = vadd.f32 %v1198, %v1246
        %v1248 = vpop.f32.mrf.mxu0
        %v1249 = vadd.f32 %v1200, %v1248
        %1250 = vmatmul.bf16.gmra.mxu0 %v640
        %v1251 = vpop.f32.mrf.mxu0
        %v1252 = vadd.f32 %v1203, %v1251
        %v1253 = vpop.f32.mrf.mxu0
        %v1254 = vadd.f32 %v1205, %v1253
        %1255 = vmatmul.bf16.gmra.mxu0 %v648
        %v1256 = vpop.f32.mrf.mxu0
        %v1257 = vadd.f32 %v1208, %v1256
        %v1258 = vpop.f32.mrf.mxu0
        %v1259 = vadd.f32 %v1210, %v1258
        %1260 = vmatmul.bf16.gmra.mxu0 %v656
        %v1261 = vpop.f32.mrf.mxu0
        %v1262 = vadd.f32 %v1213, %v1261
        %v1263 = vpop.f32.mrf.mxu0
        %v1264 = vadd.f32 %v1215, %v1263
        %1265 = vmatmul.bf16.gmra.mxu0 %v664
        %v1266 = vpop.f32.mrf.mxu0
        %v1267 = vadd.f32 %v1218, %v1266
        %v1268 = vpop.f32.mrf.mxu0
        %v1269 = vadd.f32 %v1220, %v1268
        %1270 = vmatmul.bf16.gmra.mxu0 %v672
        %v1271 = vpop.f32.mrf.mxu0
        %v1272 = vadd.f32 %v1223, %v1271
        %v1273 = vpop.f32.mrf.mxu0
        %v1274 = vadd.f32 %v1225, %v1273
        %1275 = vmatmul.bf16.gmra.mxu0 %v680
        %v1276 = vpop.f32.mrf.mxu0
        %v1277 = vadd.f32 %v1228, %v1276
        %v1278 = vpop.f32.mrf.mxu0
        %v1279 = vadd.f32 %v1230, %v1278
        %1280 = vdwg.mxu0
        %1281 = vmatpush.bf16.msra.mxu0 %v1037
        %1282 = vmatpush.bf16.msra.mxu0 %v1036
        %1283 = vmatpush.bf16.msra.mxu0 %v1035
        %1284 = vmatpush.bf16.msra.mxu0 %v1034
        %1285 = vmatpush.bf16.msra.mxu0 %v1033
        %1286 = vmatpush.bf16.msra.mxu0 %v1032
        %1287 = vmatpush.bf16.msra.mxu0 %v1031
        %1288 = vmatpush.bf16.msra.mxu0 %v1030
        %1289 = vmatmul.bf16.gmra.mxu0 %v625
        %v1290 = vpop.f32.mrf.mxu0
        %v1291 = vadd.f32 %v1242, %v1290
        %v1292 = vpop.f32.mrf.mxu0
        %v1293 = vadd.f32 %v1244, %v1292
        %1294 = vmatmul.bf16.gmra.mxu0 %v633
        %v1295 = vpop.f32.mrf.mxu0
        %v1296 = vadd.f32 %v1247, %v1295
        %v1297 = vpop.f32.mrf.mxu0
        %v1298 = vadd.f32 %v1249, %v1297
        %1299 = vmatmul.bf16.gmra.mxu0 %v641
        %v1300 = vpop.f32.mrf.mxu0
        %v1301 = vadd.f32 %v1252, %v1300
        %v1302 = vpop.f32.mrf.mxu0
        %v1303 = vadd.f32 %v1254, %v1302
        %1304 = vmatmul.bf16.gmra.mxu0 %v649
        %v1305 = vpop.f32.mrf.mxu0
        %v1306 = vadd.f32 %v1257, %v1305
        %v1307 = vpop.f32.mrf.mxu0
        %v1308 = vadd.f32 %v1259, %v1307
        %1309 = vmatmul.bf16.gmra.mxu0 %v657
        %v1310 = vpop.f32.mrf.mxu0
        %v1311 = vadd.f32 %v1262, %v1310
        %v1312 = vpop.f32.mrf.mxu0
        %v1313 = vadd.f32 %v1264, %v1312
        %1314 = vmatmul.bf16.gmra.mxu0 %v665
        %v1315 = vpop.f32.mrf.mxu0
        %v1316 = vadd.f32 %v1267, %v1315
        %v1317 = vpop.f32.mrf.mxu0
        %v1318 = vadd.f32 %v1269, %v1317
        %1319 = vmatmul.bf16.gmra.mxu0 %v673
        %v1320 = vpop.f32.mrf.mxu0
        %v1321 = vadd.f32 %v1272, %v1320
        %v1322 = vpop.f32.mrf.mxu0
        %v1323 = vadd.f32 %v1274, %v1322
        %1324 = vmatmul.bf16.gmra.mxu0 %v681
        %v1325 = vpop.f32.mrf.mxu0
        %v1326 = vadd.f32 %v1277, %v1325
        %v1327 = vpop.f32.mrf.mxu0
        %v1328 = vadd.f32 %v1279, %v1327
        %1329 = vdwg.mxu0
        %1330 = vmatpush.bf16.msra.mxu0 %v1045
        %1331 = vmatpush.bf16.msra.mxu0 %v1044
        %1332 = vmatpush.bf16.msra.mxu0 %v1043
        %1333 = vmatpush.bf16.msra.mxu0 %v1042
        %1334 = vmatpush.bf16.msra.mxu0 %v1041
        %1335 = vmatpush.bf16.msra.mxu0 %v1040
        %1336 = vmatpush.bf16.msra.mxu0 %v1039
        %1337 = vmatpush.bf16.msra.mxu0 %v1038
        %1338 = vmatmul.bf16.gmra.mxu0 %v626
        %v1339 = vpop.f32.mrf.mxu0
        %v1340 = vadd.f32 %v1291, %v1339
        %v1341 = vpop.f32.mrf.mxu0
        %v1342 = vadd.f32 %v1293, %v1341
        %1343 = vmatmul.bf16.gmra.mxu0 %v634
        %v1344 = vpop.f32.mrf.mxu0
        %v1345 = vadd.f32 %v1296, %v1344
        %v1346 = vpop.f32.mrf.mxu0
        %v1347 = vadd.f32 %v1298, %v1346
        %1348 = vmatmul.bf16.gmra.mxu0 %v642
        %v1349 = vpop.f32.mrf.mxu0
        %v1350 = vadd.f32 %v1301, %v1349
        %v1351 = vpop.f32.mrf.mxu0
        %v1352 = vadd.f32 %v1303, %v1351
        %1353 = vmatmul.bf16.gmra.mxu0 %v650
        %v1354 = vpop.f32.mrf.mxu0
        %v1355 = vadd.f32 %v1306, %v1354
        %v1356 = vpop.f32.mrf.mxu0
        %v1357 = vadd.f32 %v1308, %v1356
        %1358 = vmatmul.bf16.gmra.mxu0 %v658
        %v1359 = vpop.f32.mrf.mxu0
        %v1360 = vadd.f32 %v1311, %v1359
        %v1361 = vpop.f32.mrf.mxu0
        %v1362 = vadd.f32 %v1313, %v1361
        %1363 = vmatmul.bf16.gmra.mxu0 %v666
        %v1364 = vpop.f32.mrf.mxu0
        %v1365 = vadd.f32 %v1316, %v1364
        %v1366 = vpop.f32.mrf.mxu0
        %v1367 = vadd.f32 %v1318, %v1366
        %1368 = vmatmul.bf16.gmra.mxu0 %v674
        %v1369 = vpop.f32.mrf.mxu0
        %v1370 = vadd.f32 %v1321, %v1369
        %v1371 = vpop.f32.mrf.mxu0
        %v1372 = vadd.f32 %v1323, %v1371
        %1373 = vmatmul.bf16.gmra.mxu0 %v682
        %v1374 = vpop.f32.mrf.mxu0
        %v1375 = vadd.f32 %v1326, %v1374
        %v1376 = vpop.f32.mrf.mxu0
        %v1377 = vadd.f32 %v1328, %v1376
        %1378 = vdwg.mxu0
        %1379 = vmatpush.bf16.msra.mxu0 %v1053
        %1380 = vmatpush.bf16.msra.mxu0 %v1052
        %1381 = vmatpush.bf16.msra.mxu0 %v1051
        %1382 = vmatpush.bf16.msra.mxu0 %v1050
        %1383 = vmatpush.bf16.msra.mxu0 %v1049
        %1384 = vmatpush.bf16.msra.mxu0 %v1048
        %1385 = vmatpush.bf16.msra.mxu0 %v1047
        %1386 = vmatpush.bf16.msra.mxu0 %v1046
        %1387 = vmatmul.bf16.gmra.mxu0 %v627
        %v1388 = vpop.f32.mrf.mxu0
        %v1389 = vadd.f32 %v1340, %v1388
        %v1390 = vpop.f32.mrf.mxu0
        %v1391 = vadd.f32 %v1342, %v1390
        %1392 = vmatmul.bf16.gmra.mxu0 %v635
        %v1393 = vpop.f32.mrf.mxu0
        %v1394 = vadd.f32 %v1345, %v1393
        %v1395 = vpop.f32.mrf.mxu0
        %v1396 = vadd.f32 %v1347, %v1395
        %1397 = vmatmul.bf16.gmra.mxu0 %v643
        %v1398 = vpop.f32.mrf.mxu0
        %v1399 = vadd.f32 %v1350, %v1398
        %v1400 = vpop.f32.mrf.mxu0
        %v1401 = vadd.f32 %v1352, %v1400
        %1402 = vmatmul.bf16.gmra.mxu0 %v651
        %v1403 = vpop.f32.mrf.mxu0
        %v1404 = vadd.f32 %v1355, %v1403
        %v1405 = vpop.f32.mrf.mxu0
        %v1406 = vadd.f32 %v1357, %v1405
        %1407 = vmatmul.bf16.gmra.mxu0 %v659
        %v1408 = vpop.f32.mrf.mxu0
        %v1409 = vadd.f32 %v1360, %v1408
        %v1410 = vpop.f32.mrf.mxu0
        %v1411 = vadd.f32 %v1362, %v1410
        %1412 = vmatmul.bf16.gmra.mxu0 %v667
        %v1413 = vpop.f32.mrf.mxu0
        %v1414 = vadd.f32 %v1365, %v1413
        %v1415 = vpop.f32.mrf.mxu0
        %v1416 = vadd.f32 %v1367, %v1415
        %1417 = vmatmul.bf16.gmra.mxu0 %v675
        %v1418 = vpop.f32.mrf.mxu0
        %v1419 = vadd.f32 %v1370, %v1418
        %v1420 = vpop.f32.mrf.mxu0
        %v1421 = vadd.f32 %v1372, %v1420
        %1422 = vmatmul.bf16.gmra.mxu0 %v683
        %v1423 = vpop.f32.mrf.mxu0
        %v1424 = vadd.f32 %v1375, %v1423
        %v1425 = vpop.f32.mrf.mxu0
        %v1426 = vadd.f32 %v1377, %v1425
        %1427 = vdwg.mxu0
        %1428 = vmatpush.bf16.msra.mxu0 %v1061
        %1429 = vmatpush.bf16.msra.mxu0 %v1060
        %1430 = vmatpush.bf16.msra.mxu0 %v1059
        %1431 = vmatpush.bf16.msra.mxu0 %v1058
        %1432 = vmatpush.bf16.msra.mxu0 %v1057
        %1433 = vmatpush.bf16.msra.mxu0 %v1056
        %1434 = vmatpush.bf16.msra.mxu0 %v1055
        %1435 = vmatpush.bf16.msra.mxu0 %v1054
        %1436 = vmatmul.bf16.gmra.mxu0 %v628
        %v1437 = vpop.f32.mrf.mxu0
        %v1438 = vadd.f32 %v1389, %v1437
        %v1439 = vpop.f32.mrf.mxu0
        %v1440 = vadd.f32 %v1391, %v1439
        %1441 = vmatmul.bf16.gmra.mxu0 %v636
        %v1442 = vpop.f32.mrf.mxu0
        %v1443 = vadd.f32 %v1394, %v1442
        %v1444 = vpop.f32.mrf.mxu0
        %v1445 = vadd.f32 %v1396, %v1444
        %1446 = vmatmul.bf16.gmra.mxu0 %v644
        %v1447 = vpop.f32.mrf.mxu0
        %v1448 = vadd.f32 %v1399, %v1447
        %v1449 = vpop.f32.mrf.mxu0
        %v1450 = vadd.f32 %v1401, %v1449
        %1451 = vmatmul.bf16.gmra.mxu0 %v652
        %v1452 = vpop.f32.mrf.mxu0
        %v1453 = vadd.f32 %v1404, %v1452
        %v1454 = vpop.f32.mrf.mxu0
        %v1455 = vadd.f32 %v1406, %v1454
        %1456 = vmatmul.bf16.gmra.mxu0 %v660
        %v1457 = vpop.f32.mrf.mxu0
        %v1458 = vadd.f32 %v1409, %v1457
        %v1459 = vpop.f32.mrf.mxu0
        %v1460 = vadd.f32 %v1411, %v1459
        %1461 = vmatmul.bf16.gmra.mxu0 %v668
        %v1462 = vpop.f32.mrf.mxu0
        %v1463 = vadd.f32 %v1414, %v1462
        %v1464 = vpop.f32.mrf.mxu0
        %v1465 = vadd.f32 %v1416, %v1464
        %1466 = vmatmul.bf16.gmra.mxu0 %v676
        %v1467 = vpop.f32.mrf.mxu0
        %v1468 = vadd.f32 %v1419, %v1467
        %v1469 = vpop.f32.mrf.mxu0
        %v1470 = vadd.f32 %v1421, %v1469
        %1471 = vmatmul.bf16.gmra.mxu0 %v684
        %v1472 = vpop.f32.mrf.mxu0
        %v1473 = vadd.f32 %v1424, %v1472
        %v1474 = vpop.f32.mrf.mxu0
        %v1475 = vadd.f32 %v1426, %v1474
        %1476 = vdwg.mxu0
        %1477 = vmatpush.bf16.msra.mxu0 %v1069
        %1478 = vmatpush.bf16.msra.mxu0 %v1068
        %1479 = vmatpush.bf16.msra.mxu0 %v1067
        %1480 = vmatpush.bf16.msra.mxu0 %v1066
        %1481 = vmatpush.bf16.msra.mxu0 %v1065
        %1482 = vmatpush.bf16.msra.mxu0 %v1064
        %1483 = vmatpush.bf16.msra.mxu0 %v1063
        %1484 = vmatpush.bf16.msra.mxu0 %v1062
        %1485 = vmatmul.bf16.gmra.mxu0 %v629
        %v1486 = vpop.f32.mrf.mxu0
        %v1487 = vadd.f32 %v1438, %v1486
        %v1488 = vpop.f32.mrf.mxu0
        %v1489 = vadd.f32 %v1440, %v1488
        %1490 = vmatmul.bf16.gmra.mxu0 %v637
        %v1491 = vpop.f32.mrf.mxu0
        %v1492 = vadd.f32 %v1443, %v1491
        %v1493 = vpop.f32.mrf.mxu0
        %v1494 = vadd.f32 %v1445, %v1493
        %1495 = vmatmul.bf16.gmra.mxu0 %v645
        %v1496 = vpop.f32.mrf.mxu0
        %v1497 = vadd.f32 %v1448, %v1496
        %v1498 = vpop.f32.mrf.mxu0
        %v1499 = vadd.f32 %v1450, %v1498
        %1500 = vmatmul.bf16.gmra.mxu0 %v653
        %v1501 = vpop.f32.mrf.mxu0
        %v1502 = vadd.f32 %v1453, %v1501
        %v1503 = vpop.f32.mrf.mxu0
        %v1504 = vadd.f32 %v1455, %v1503
        %1505 = vmatmul.bf16.gmra.mxu0 %v661
        %v1506 = vpop.f32.mrf.mxu0
        %v1507 = vadd.f32 %v1458, %v1506
        %v1508 = vpop.f32.mrf.mxu0
        %v1509 = vadd.f32 %v1460, %v1508
        %1510 = vmatmul.bf16.gmra.mxu0 %v669
        %v1511 = vpop.f32.mrf.mxu0
        %v1512 = vadd.f32 %v1463, %v1511
        %v1513 = vpop.f32.mrf.mxu0
        %v1514 = vadd.f32 %v1465, %v1513
        %1515 = vmatmul.bf16.gmra.mxu0 %v677
        %v1516 = vpop.f32.mrf.mxu0
        %v1517 = vadd.f32 %v1468, %v1516
        %v1518 = vpop.f32.mrf.mxu0
        %v1519 = vadd.f32 %v1470, %v1518
        %1520 = vmatmul.bf16.gmra.mxu0 %v685
        %v1521 = vpop.f32.mrf.mxu0
        %v1522 = vadd.f32 %v1473, %v1521
        %v1523 = vpop.f32.mrf.mxu0
        %v1524 = vadd.f32 %v1475, %v1523
        %1525 = vdwg.mxu0
        %vm1526 = vcmask 523264
        %1527 = vst.msk [vmem:[%s232] sm:$0xff] %vm1526, %v1487
        %1528 = vst.msk [vmem:[%s232 + $0x8] sm:$0xff] %vm1526, %v1489
        %1529 = vst.msk [vmem:[%s232 + $0x10] sm:$0xff] %vm1526, %v1492
        %1530 = vst.msk [vmem:[%s232 + $0x18] sm:$0xff] %vm1526, %v1494
        %1531 = vst.msk [vmem:[%s232 + $0x20] sm:$0xff] %vm1526, %v1497
        %1532 = vst.msk [vmem:[%s232 + $0x28] sm:$0xff] %vm1526, %v1499
        %1533 = vst.msk [vmem:[%s232 + $0x30] sm:$0xff] %vm1526, %v1502
        %1534 = vst.msk [vmem:[%s232 + $0x38] sm:$0xff] %vm1526, %v1504
        %1535 = vst.msk [vmem:[%s232 + $0x40] sm:$0xff] %vm1526, %v1507
        %1536 = vst.msk [vmem:[%s232 + $0x48] sm:$0xff] %vm1526, %v1509
        %1537 = vst.msk [vmem:[%s232 + $0x50] sm:$0xff] %vm1526, %v1512
        %1538 = vst.msk [vmem:[%s232 + $0x58] sm:$0xff] %vm1526, %v1514
        %1539 = vst.msk [vmem:[%s232 + $0x60] sm:$0xff] %vm1526, %v1517
        %1540 = vst.msk [vmem:[%s232 + $0x68] sm:$0xff] %vm1526, %v1519
        %1541 = vst.msk [vmem:[%s232 + $0x70] sm:$0xff] %vm1526, %v1522
        %1542 = vst.msk [vmem:[%s232 + $0x78] sm:$0xff] %vm1526, %v1524
        %v1543 = vsel %vm1526, %v1487, 0.0
        %v1544 = vsel %vm1526, %v1489, 0.0
        %v1545 = vadd.f32 %v1543, %v1544
        %v1546 = vsel %vm1526, %v1492, 0.0
        %v1547 = vadd.f32 %v1545, %v1546
        %v1548 = vsel %vm1526, %v1494, 0.0
        %v1549 = vadd.f32 %v1547, %v1548
        %v1550 = vsel %vm1526, %v1497, 0.0
        %v1551 = vadd.f32 %v1549, %v1550
        %v1552 = vsel %vm1526, %v1499, 0.0
        %v1553 = vadd.f32 %v1551, %v1552
        %v1554 = vsel %vm1526, %v1502, 0.0
        %v1555 = vadd.f32 %v1553, %v1554
        %v1556 = vsel %vm1526, %v1504, 0.0
        %v1557 = vadd.f32 %v1555, %v1556
        %v1558 = vsel %vm1526, %v1507, 0.0
        %v1559 = vadd.f32 %v1557, %v1558
        %v1560 = vsel %vm1526, %v1509, 0.0
        %v1561 = vadd.f32 %v1559, %v1560
        %v1562 = vsel %vm1526, %v1512, 0.0
        %v1563 = vadd.f32 %v1561, %v1562
        %v1564 = vsel %vm1526, %v1514, 0.0
        %v1565 = vadd.f32 %v1563, %v1564
        %v1566 = vsel %vm1526, %v1517, 0.0
        %v1567 = vadd.f32 %v1565, %v1566
        %v1568 = vsel %vm1526, %v1519, 0.0
        %v1569 = vadd.f32 %v1567, %v1568
        %v1570 = vsel %vm1526, %v1522, 0.0
        %v1571 = vadd.f32 %v1569, %v1570
        %v1572 = vsel %vm1526, %v1524, 0.0
        %v1573 = vadd.f32 %v1571, %v1572
        %v1574 = vrot.slane %v1573, 4
        %v1575 = vadd.f32 %v1573, %v1574
        %v1576 = vrot.slane %v1575, 2
        %v1577 = vadd.f32 %v1575, %v1576
        %v1578 = vrot.slane %v1577, 1
        %v1579 = vadd.f32 %v1577, %v1578
        %vm1580 = vcmask 516096
        %1581 = vst.msk [vmem:[%s226] sm:$0x1] %vm1580, %v1579
        %v1582 = vmul.f32 %v1487, %v1487
        %v1583 = vmul.f32 %v1489, %v1489
        %v1584 = vmul.f32 %v1492, %v1492
        %v1585 = vmul.f32 %v1494, %v1494
        %v1586 = vmul.f32 %v1497, %v1497
        %v1587 = vmul.f32 %v1499, %v1499
        %v1588 = vmul.f32 %v1502, %v1502
        %v1589 = vmul.f32 %v1504, %v1504
        %v1590 = vmul.f32 %v1507, %v1507
        %v1591 = vmul.f32 %v1509, %v1509
        %v1592 = vmul.f32 %v1512, %v1512
        %v1593 = vmul.f32 %v1514, %v1514
        %v1594 = vmul.f32 %v1517, %v1517
        %v1595 = vmul.f32 %v1519, %v1519
        %v1596 = vmul.f32 %v1522, %v1522
        %v1597 = vmul.f32 %v1524, %v1524
        %v1598 = vsel %vm1526, %v1582, 0.0
        %v1599 = vsel %vm1526, %v1583, 0.0
        %v1600 = vadd.f32 %v1598, %v1599
        %v1601 = vsel %vm1526, %v1584, 0.0
        %v1602 = vadd.f32 %v1600, %v1601
        %v1603 = vsel %vm1526, %v1585, 0.0
        %v1604 = vadd.f32 %v1602, %v1603
        %v1605 = vsel %vm1526, %v1586, 0.0
        %v1606 = vadd.f32 %v1604, %v1605
        %v1607 = vsel %vm1526, %v1587, 0.0
        %v1608 = vadd.f32 %v1606, %v1607
        %v1609 = vsel %vm1526, %v1588, 0.0
        %v1610 = vadd.f32 %v1608, %v1609
        %v1611 = vsel %vm1526, %v1589, 0.0
        %v1612 = vadd.f32 %v1610, %v1611
        %v1613 = vsel %vm1526, %v1590, 0.0
        %v1614 = vadd.f32 %v1612, %v1613
        %v1615 = vsel %vm1526, %v1591, 0.0
        %v1616 = vadd.f32 %v1614, %v1615
        %v1617 = vsel %vm1526, %v1592, 0.0
        %v1618 = vadd.f32 %v1616, %v1617
        %v1619 = vsel %vm1526, %v1593, 0.0
        %v1620 = vadd.f32 %v1618, %v1619
        %v1621 = vsel %vm1526, %v1594, 0.0
        %v1622 = vadd.f32 %v1620, %v1621
        %v1623 = vsel %vm1526, %v1595, 0.0
        %v1624 = vadd.f32 %v1622, %v1623
        %v1625 = vsel %vm1526, %v1596, 0.0
        %v1626 = vadd.f32 %v1624, %v1625
        %v1627 = vsel %vm1526, %v1597, 0.0
        %v1628 = vadd.f32 %v1626, %v1627
        %v1629 = vrot.slane %v1628, 4
        %v1630 = vadd.f32 %v1628, %v1629
        %v1631 = vrot.slane %v1630, 2
        %v1632 = vadd.f32 %v1630, %v1631
        %v1633 = vrot.slane %v1632, 1
        %v1634 = vadd.f32 %v1632, %v1633
        %1635 = vst.msk [vmem:[%s226 + $0x1] sm:$0x1] %vm1580, %v1634
        %s1636 = smul.u32 16, %s22
        %p1637 = scmp.lt.s32.totalorder %s1636, 31
        %s1638 = scalar_select %p1637, %s1636, 31
        %s1639 = smul.addr %s1638, 8
        %s1640 = scalar_lea.vmem %s3, %s1639
        %s1641 = sand.u32 %s124, 1
        %s1642 = scalar_lea.sflag [#allocation4], %s1641
        %s1643 = sand.u32 %s124, 1
        %s1644 = smul.addr %s1643, 2
        %s1645 = scalar_lea.vmem [#allocation5], %s1644
        // Predicated region
        $region37: #{tpu_custom_call.1} parent=31 // pred_check
          %p1646 = pneg %p108
        $region38: #{tpu_custom_call.1} parent=31 // pred_check_branch
          %1648 = sbr.rel (%p1646) target = $region40
        $region39: #{tpu_custom_call.1} parent=31 // pred_region
          %s1649 = smul.u32 16, %s22
        $region40: #{tpu_custom_call.1} parent=31 // pred_fallthru
          _
        // Predicated region
        $region41: #{tpu_custom_call.1} parent=31 // pred_check
          %p1650 = pneg %p134
        $region42: #{tpu_custom_call.1} parent=31 // pred_check_branch
          %1652 = sbr.rel (%p1650) target = $region44
        $region43: #{tpu_custom_call.1} parent=31 // pred_region
          %1654 = vsyncadd %s1642, 0
          %s1655 = smul.addr %s22, 2
          %s1656 = scalar_lea.hbm %s4, %s1655
          %s1658 = sshll.u32 %s1645, 4
          %s1659 = int_to_ptr.vmem [resolvable:$true] %s1658
          %s1660 = sshll.u32 %s1656, 4
          %s1661 = int_to_ptr.hbm [resolvable:$true] %s1660
          %1663 = dma.vmem_to_hbm [thread:$0]  %s1659, 32, %s1661, %s1642
        $region44: #{tpu_custom_call.1} parent=31 // pred_fallthru
          _
      $region32: #{tpu_custom_call.1} parent=5 // pred_fallthru
        _
      %p1664 = scmp.le.s32.totalorder 2, %s17
      // Predicated region
      $region45: #{tpu_custom_call.1} parent=5 // pred_check
        %p1665 = pneg %p1664
      $region46: #{tpu_custom_call.1} parent=5 // pred_check_branch
        %1667 = sbr.rel (%p1665) target = $region48
      $region47: #{tpu_custom_call.1} parent=5 // pred_region
        %s1668 = ssub.s32 %s17, 2
        // Predicated region
        $region49: #{tpu_custom_call.1} parent=47 // pred_check
          %p1669 = pneg %p114
        $region50: #{tpu_custom_call.1} parent=47 // pred_check_branch
          %1671 = sbr.rel (%p1669) target = $region52
        $region51: #{tpu_custom_call.1} parent=47 // pred_region
          %s1672 = smul.u32 16, %s23
          %p1673 = scmp.lt.s32.totalorder %s1672, 31
          %s1674 = scalar_select %p1673, %s1672, 31
          %s1675 = smul.addr %s1674, 8
          %s1676 = scalar_lea.vmem %s3, %s1675
        $region52: #{tpu_custom_call.1} parent=47 // pred_fallthru
          _
        // Predicated region
        $region53: #{tpu_custom_call.1} parent=47 // pred_check
          %p1677 = pneg %p140
        $region54: #{tpu_custom_call.1} parent=47 // pred_check_branch
          %1679 = sbr.rel (%p1677) target = $region56
        $region55: #{tpu_custom_call.1} parent=47 // pred_region
          %s1680 = sand.u32 %s125, 1
          %s1681 = scalar_lea.sflag [#allocation4], %s1680
          %s1682 = sand.u32 %s125, 1
          %s1683 = smul.addr %s1682, 2
          %s1684 = scalar_lea.vmem [#allocation5], %s1683
          %1686 = dma.done %s1681, 32
        $region56: #{tpu_custom_call.1} parent=47 // pred_fallthru
          _
      $region48: #{tpu_custom_call.1} parent=5 // pred_fallthru
        _
    $region6: #{tpu_custom_call.1} parent=1 // loop_footer
      %s21 = sadd.s32 1, %s17
    $region7: #{tpu_custom_call.1} parent=1 // loop_footer_branch
      %16 = sbr.rel target = $region3
    $region8: #{tpu_custom_call.1} parent=1 // loop_exit
      _
    %1687 = vsyncpa [#allocation3], 1
    %s1688 = scalar_lea.sflag [#allocation3], 1
    %1689 = vsyncpa %s1688, 1
    %1690 = vsyncpa [#allocation4], 1
    %s1691 = scalar_lea.sflag [#allocation4], 1
    %1692 = vsyncpa %s1691, 1

</llo_original>
